<compile_context>
chip_gen: v6e
topology: v6e:2x2x1
jax: 0.10.0
libtpu: 0.0.40
codegen_flags: <defaults>
</compile_context>

<pallas_src>
import jax
import jax.numpy as jnp
from jax import lax
from jax.experimental import pallas as pl
from jax.experimental.pallas import tpu as pltpu

HIDDEN = 5
LANES = 128


def _pick_tiles(T, S):
    """Choose (sub_tile, s_pad, t_chunk).

    sub_tile : batch sublane-rows (x 128 lanes) per grid step
    s_pad    : S padded to a multiple of sub_tile
    t_chunk  : timesteps per grid step (time axis chunked for long T)
    """
    LANE_ROW_BYTES = LANES * 4
    # Per-buffer x tile budget.  Total VMEM ~= 2x (double-buffered x)
    # + 5x (pre-projection scratch) + small  ->  ~7x this; safe on v7x
    # (64 MiB physical / 32 MiB scoped) as well as v5e/v6e.
    X_TILE_BUDGET = 2 * 1024 * 1024
    MAX_ELEMS = X_TILE_BUDGET // LANE_ROW_BYTES          # t_chunk * sub_tile cap
    TARGET_ELEMS = 2048   # a few us of VALU work to amortize ~0.35 us grid overhead

    if S <= 8:
        # A sublane tile must be a multiple of 8 or the full dim -> can't split.
        sub_tile = S
    else:
        want = max(8, ((TARGET_ELEMS // max(T, 1)) // 8) * 8)
        half = max(8, ((S // 2) // 8) * 8)   # >=2 batch tiles (v7x: 2 TensorCores)
        sub_tile = min(want, half)
    s_pad = ((S + sub_tile - 1) // sub_tile) * sub_tile
    t_chunk = max(1, min(T, MAX_ELEMS // sub_tile))
    return sub_tile, s_pad, t_chunk


def _make_kernel(total_t, t_chunk, needs_mask, unroll):
    def kernel(w_ih_ref, w_hh_ref, b_ref, w_fc_ref, b_fc_ref,
               x_ref, out_ref, pre_ref, h_ref):
        """One (batch tile, time chunk) grid step.

        w_ih_ref : (H,)    f32 SMEM   W_ih[:, 0]
        w_hh_ref : (H*H,)  f32 SMEM   W_hh row-major
        b_ref    : (H,)    f32 SMEM   b_ih + b_hh
        w_fc_ref : (H,)    f32 SMEM   W_fc[0, :]
        b_fc_ref : (1,)    f32 SMEM
        x_ref    : (t_chunk, sub_tile, 128) f32 VMEM  (time, batch-sublane, batch-lane)
        out_ref  : (sub_tile, 128)          f32 VMEM  (lane-dense output slab)
        pre_ref  : (H, t_chunk, sub_tile, 128) f32 VMEM scratch (input projection)
        h_ref    : (H, sub_tile, 128)          f32 VMEM scratch (carried hidden state)
        """
        ti = pl.program_id(1)

        # Hoist all weight scalars (SMEM) out of the loops.
        w_ih = [w_ih_ref[i] for i in range(HIDDEN)]
        w_hh = [[w_hh_ref[i * HIDDEN + j] for j in range(HIDDEN)]
                for i in range(HIDDEN)]
        b = [b_ref[i] for i in range(HIDDEN)]
        w_fc = [w_fc_ref[i] for i in range(HIDDEN)]
        b_fc = b_fc_ref[0]

        # New batch tile -> reset the carried hidden state.
        @pl.when(ti == 0)
        def _():
            h_ref[...] = jnp.zeros_like(h_ref)

        # Step-independent input projection for the whole chunk at full vreg
        # density; this is the only work not on the serial h->h chain.
        x_chunk = x_ref[...]                                   # (Tc, sub, 128)
        for i in range(HIDDEN):
            pre_ref[i] = x_chunk * w_ih[i] + b[i]

        hs0 = tuple(h_ref[i] for i in range(HIDDEN))           # (sub, 128) each

        def step(t, hs):
            new_hs = []
            for i in range(HIDDEN):
                # 6 terms: precomputed input term + 5 h*w products.
                terms = [pre_ref[i, t]] + [hs[j] * w_hh[i][j]
                                           for j in range(HIDDEN)]
                # Pairwise tree reduction: dependent adds 6 -> 3.
                while len(terms) > 1:
                    nxt = [terms[k] + terms[k + 1]
                           for k in range(0, len(terms) - 1, 2)]
                    if len(terms) % 2:
                        nxt.append(terms[-1])
                    terms = nxt
                new_hs.append(jnp.tanh(terms[0]))              # EUP
            if needs_mask:
                # Last time chunk may be zero-padded: freeze h on padded steps.
                valid = (ti * t_chunk + t) < total_t
                new_hs = [jnp.where(valid, nh, h) for nh, h in zip(new_hs, hs)]
            return tuple(new_hs)

        # Steps are strictly serial (step t+1's h->h terms depend on step t's
        # tanh); a modest unroll only helps LLO scheduling / address reuse.
        hs = lax.fori_loop(0, t_chunk, step, hs0, unroll=unroll)

        for i in range(HIDDEN):
            h_ref[i] = hs[i]

        # Head: fc1(relu(h_T)), written once on the last time chunk.
        @pl.when(ti == pl.num_programs(1) - 1)
        def _():
            acc = jnp.maximum(hs[0], 0.0) * w_fc[0] + b_fc
            for i in range(1, HIDDEN):
                acc = acc + jnp.maximum(hs[i], 0.0) * w_fc[i]
            out_ref[...] = acc

    return kernel


def rnn_model_forward(x, params):
    """x: (B, T, 1) float32 -> (B, 1) float32."""
    B, T, in_feat = x.shape
    assert in_feat == 1
    x2 = x.reshape(B, T).astype(jnp.float32)                   # (B, T)

    B_pad = max(LANES, ((B + LANES - 1) // LANES) * LANES)
    S = B_pad // LANES
    sub_tile, s_pad, t_chunk = _pick_tiles(T, S)
    n_bt = s_pad // sub_tile
    n_tc = (T + t_chunk - 1) // t_chunk
    T_pad = n_tc * t_chunk

    # Relayout to time-major (T_pad, s_pad, 128): batch dense on sublanes+lanes
    # so every per-timestep slab fills whole vregs.  (One extra XLA pass over x;
    # accepting x time-major upstream would remove it.)
    xb = jnp.pad(x2, ((0, s_pad * LANES - B), (0, T_pad - T)))
    x_tsl = jnp.transpose(xb.reshape(s_pad, LANES, T_pad), (2, 0, 1))

    w_ih = params["w_ih"].reshape(HIDDEN).astype(jnp.float32)
    w_hh = params["w_hh"].reshape(HIDDEN * HIDDEN).astype(jnp.float32)
    b = (params["b_ih"] + params["b_hh"]).astype(jnp.float32)
    w_fc = params["w_fc"].reshape(HIDDEN).astype(jnp.float32)
    b_fc = params["b_fc"].reshape(1).astype(jnp.float32)

    smem = pl.BlockSpec(memory_space=pltpu.MemorySpace.SMEM)
    kernel = _make_kernel(total_t=T, t_chunk=t_chunk,
                          needs_mask=(T_pad != T),
                          unroll=min(8, t_chunk))

    out = pl.pallas_call(
        kernel,
        out_shape=jax.ShapeDtypeStruct((s_pad, LANES), jnp.float32),
        grid=(n_bt, n_tc),
        in_specs=[smem, smem, smem, smem, smem,
                  pl.BlockSpec((t_chunk, sub_tile, LANES),
                               lambda bi, ti: (ti, bi, 0))],
        out_specs=pl.BlockSpec((sub_tile, LANES), lambda bi, ti: (bi, 0)),
        scratch_shapes=[
            pltpu.VMEM((HIDDEN, t_chunk, sub_tile, LANES), jnp.float32),
            pltpu.VMEM((HIDDEN, sub_tile, LANES), jnp.float32),
        ],
        compiler_params=pltpu.CompilerParams(
            dimension_semantics=("parallel", "arbitrary"),
            vmem_limit_bytes=32 * 1024 * 1024),
    )(w_ih, w_hh, b, w_fc, b_fc, x_tsl)

    return out.reshape(s_pad * LANES)[:B].reshape(B, 1)


def rnn_model_reference(x, params):
    """Pure-JAX reference mirroring torch semantics (tanh RNN, batch_first)."""
    B, T, _ = x.shape
    h = jnp.zeros((B, HIDDEN), jnp.float32)
    for t in range(T):
        x_t = x[:, t, :]                                        # (B, 1)
        h = jnp.tanh(x_t @ params["w_ih"].T + params["b_ih"]
                     + h @ params["w_hh"].T + params["b_hh"])
    out = jnp.maximum(h, 0.0) @ params["w_fc"].T + params["b_fc"]
    return out


def init_params(key):
    # PyTorch default init: U(-1/sqrt(hidden), 1/sqrt(hidden)).
    bound = 1.0 / jnp.sqrt(jnp.float32(HIDDEN))
    ks = jax.random.split(key, 6)
    u = lambda k, shape: jax.random.uniform(k, shape, jnp.float32, -bound, bound)
    return {
        "w_ih": u(ks[0], (HIDDEN, 1)),       # RNN weight_ih_l0
        "w_hh": u(ks[1], (HIDDEN, HIDDEN)),  # RNN weight_hh_l0
        "b_ih": u(ks[2], (HIDDEN,)),
        "b_hh": u(ks[3], (HIDDEN,)),
        "w_fc": u(ks[4], (1, HIDDEN)),       # fc1 weight
        "b_fc": u(ks[5], (1,)),
    }


if __name__ == "__main__":
    key = jax.random.PRNGKey(0)
    k_x, k_p = jax.random.split(key)

    B, T = 2, 8
    x = jax.random.normal(k_x, (B, T, 1), dtype=jnp.float32)
    params = init_params(k_p)

    out = rnn_model_forward(x, params)
    out = jax.block_until_ready(out)

    ref = rnn_model_reference(x, params)
    assert out.shape == (B, 1)
    # EUP tanh approximation error compounds through the T-step recurrence,
    # so the tolerance scales with T.
    tol = 1e-5 * max(T, 1)
    assert jnp.allclose(out, ref, atol=tol, rtol=tol), (out, ref)

    print("KERNEL_OK")
</pallas_src>

<mosaic_0001>
module attributes {stable_mosaic.version = 11 : i64} {
  func.func @kernel(%arg0: i32, %arg1: i32, %arg2: memref<5xf32, #tpu.memory_space<smem>>, %arg3: memref<25xf32, #tpu.memory_space<smem>>, %arg4: memref<5xf32, #tpu.memory_space<smem>>, %arg5: memref<5xf32, #tpu.memory_space<smem>>, %arg6: memref<1xf32, #tpu.memory_space<smem>>, %arg7: memref<8x1x128xf32, #tpu.memory_space<vmem>>, %arg8: memref<1x128xf32, #tpu.memory_space<vmem>>, %arg9: memref<5x8x1x128xf32, #tpu.memory_space<vmem>>, %arg10: memref<5x1x128xf32, #tpu.memory_space<vmem>>) attributes {dimension_semantics = [#tpu.dimension_semantics<parallel>, #tpu.dimension_semantics<arbitrary>], iteration_bounds = array<i64: 1, 1>, scalar_prefetch = 0 : i64, scratch_operands = 2 : i64, tpu.core_type = #tpu.core_type<tc>, window_params = [{transform_indices = @transform_0, window_bounds = array<i64: 5>}, {transform_indices = @transform_1, window_bounds = array<i64: 25>}, {transform_indices = @transform_2, window_bounds = array<i64: 5>}, {transform_indices = @transform_3, window_bounds = array<i64: 5>}, {transform_indices = @transform_4, window_bounds = array<i64: 1>}, {transform_indices = @transform_5, window_bounds = array<i64: 8, 1, 128>}, {transform_indices = @transform_6, window_bounds = array<i64: 1, 128>}]} {
    %c0 = arith.constant 0 : index
    %0 = memref.load %arg2[%c0] : memref<5xf32, #tpu.memory_space<smem>>
    %c1 = arith.constant 1 : index
    %1 = memref.load %arg2[%c1] : memref<5xf32, #tpu.memory_space<smem>>
    %c2 = arith.constant 2 : index
    %2 = memref.load %arg2[%c2] : memref<5xf32, #tpu.memory_space<smem>>
    %c3 = arith.constant 3 : index
    %3 = memref.load %arg2[%c3] : memref<5xf32, #tpu.memory_space<smem>>
    %c4 = arith.constant 4 : index
    %4 = memref.load %arg2[%c4] : memref<5xf32, #tpu.memory_space<smem>>
    %c0_0 = arith.constant 0 : index
    %5 = memref.load %arg3[%c0_0] : memref<25xf32, #tpu.memory_space<smem>>
    %c1_1 = arith.constant 1 : index
    %6 = memref.load %arg3[%c1_1] : memref<25xf32, #tpu.memory_space<smem>>
    %c2_2 = arith.constant 2 : index
    %7 = memref.load %arg3[%c2_2] : memref<25xf32, #tpu.memory_space<smem>>
    %c3_3 = arith.constant 3 : index
    %8 = memref.load %arg3[%c3_3] : memref<25xf32, #tpu.memory_space<smem>>
    %c4_4 = arith.constant 4 : index
    %9 = memref.load %arg3[%c4_4] : memref<25xf32, #tpu.memory_space<smem>>
    %c5 = arith.constant 5 : index
    %10 = memref.load %arg3[%c5] : memref<25xf32, #tpu.memory_space<smem>>
    %c6 = arith.constant 6 : index
    %11 = memref.load %arg3[%c6] : memref<25xf32, #tpu.memory_space<smem>>
    %c7 = arith.constant 7 : index
    %12 = memref.load %arg3[%c7] : memref<25xf32, #tpu.memory_space<smem>>
    %c8 = arith.constant 8 : index
    %13 = memref.load %arg3[%c8] : memref<25xf32, #tpu.memory_space<smem>>
    %c9 = arith.constant 9 : index
    %14 = memref.load %arg3[%c9] : memref<25xf32, #tpu.memory_space<smem>>
    %c10 = arith.constant 10 : index
    %15 = memref.load %arg3[%c10] : memref<25xf32, #tpu.memory_space<smem>>
    %c11 = arith.constant 11 : index
    %16 = memref.load %arg3[%c11] : memref<25xf32, #tpu.memory_space<smem>>
    %c12 = arith.constant 12 : index
    %17 = memref.load %arg3[%c12] : memref<25xf32, #tpu.memory_space<smem>>
    %c13 = arith.constant 13 : index
    %18 = memref.load %arg3[%c13] : memref<25xf32, #tpu.memory_space<smem>>
    %c14 = arith.constant 14 : index
    %19 = memref.load %arg3[%c14] : memref<25xf32, #tpu.memory_space<smem>>
    %c15 = arith.constant 15 : index
    %20 = memref.load %arg3[%c15] : memref<25xf32, #tpu.memory_space<smem>>
    %c16 = arith.constant 16 : index
    %21 = memref.load %arg3[%c16] : memref<25xf32, #tpu.memory_space<smem>>
    %c17 = arith.constant 17 : index
    %22 = memref.load %arg3[%c17] : memref<25xf32, #tpu.memory_space<smem>>
    %c18 = arith.constant 18 : index
    %23 = memref.load %arg3[%c18] : memref<25xf32, #tpu.memory_space<smem>>
    %c19 = arith.constant 19 : index
    %24 = memref.load %arg3[%c19] : memref<25xf32, #tpu.memory_space<smem>>
    %c20 = arith.constant 20 : index
    %25 = memref.load %arg3[%c20] : memref<25xf32, #tpu.memory_space<smem>>
    %c21 = arith.constant 21 : index
    %26 = memref.load %arg3[%c21] : memref<25xf32, #tpu.memory_space<smem>>
    %c22 = arith.constant 22 : index
    %27 = memref.load %arg3[%c22] : memref<25xf32, #tpu.memory_space<smem>>
    %c23 = arith.constant 23 : index
    %28 = memref.load %arg3[%c23] : memref<25xf32, #tpu.memory_space<smem>>
    %c24 = arith.constant 24 : index
    %29 = memref.load %arg3[%c24] : memref<25xf32, #tpu.memory_space<smem>>
    %c0_5 = arith.constant 0 : index
    %30 = memref.load %arg4[%c0_5] : memref<5xf32, #tpu.memory_space<smem>>
    %c1_6 = arith.constant 1 : index
    %31 = memref.load %arg4[%c1_6] : memref<5xf32, #tpu.memory_space<smem>>
    %c2_7 = arith.constant 2 : index
    %32 = memref.load %arg4[%c2_7] : memref<5xf32, #tpu.memory_space<smem>>
    %c3_8 = arith.constant 3 : index
    %33 = memref.load %arg4[%c3_8] : memref<5xf32, #tpu.memory_space<smem>>
    %c4_9 = arith.constant 4 : index
    %34 = memref.load %arg4[%c4_9] : memref<5xf32, #tpu.memory_space<smem>>
    %c0_10 = arith.constant 0 : index
    %35 = memref.load %arg5[%c0_10] : memref<5xf32, #tpu.memory_space<smem>>
    %c1_11 = arith.constant 1 : index
    %36 = memref.load %arg5[%c1_11] : memref<5xf32, #tpu.memory_space<smem>>
    %c2_12 = arith.constant 2 : index
    %37 = memref.load %arg5[%c2_12] : memref<5xf32, #tpu.memory_space<smem>>
    %c3_13 = arith.constant 3 : index
    %38 = memref.load %arg5[%c3_13] : memref<5xf32, #tpu.memory_space<smem>>
    %c4_14 = arith.constant 4 : index
    %39 = memref.load %arg5[%c4_14] : memref<5xf32, #tpu.memory_space<smem>>
    %c0_15 = arith.constant 0 : index
    %40 = memref.load %arg6[%c0_15] : memref<1xf32, #tpu.memory_space<smem>>
    %c0_i32 = arith.constant 0 : i32
    %41 = arith.cmpi eq, %arg1, %c0_i32 : i32
    %42 = arith.extui %41 : i1 to i32
    %c0_i32_16 = arith.constant 0 : i32
    %43 = arith.cmpi ne, %42, %c0_i32_16 : i32
    scf.if %43 {
      %cst = arith.constant 0.000000e+00 : f32
      %868 = vector.broadcast %cst : f32 to vector<5x1x128xf32>
      %c0_193 = arith.constant 0 : index
      %c0_194 = arith.constant 0 : index
      %c0_195 = arith.constant 0 : index
      %869 = vector.load %arg10[%c0_193, %c0_194, %c0_195] : memref<5x1x128xf32, #tpu.memory_space<vmem>>, vector<5x1x128xf32>
      tpu.vector_store %arg10[%c0_193, %c0_194, %c0_195], %868 {strides = array<i32>} : memref<5x1x128xf32, #tpu.memory_space<vmem>>, vector<5x1x128xf32>,
    } else {
    }
    %c0_17 = arith.constant 0 : index
    %c0_18 = arith.constant 0 : index
    %c0_19 = arith.constant 0 : index
    %44 = vector.load %arg7[%c0_17, %c0_18, %c0_19] : memref<8x1x128xf32, #tpu.memory_space<vmem>>, vector<8x1x128xf32>
    %45 = vector.broadcast %0 : f32 to vector<8x1x128xf32>
    %46 = arith.mulf %44, %45 : vector<8x1x128xf32>
    %47 = vector.broadcast %30 : f32 to vector<8x1x128xf32>
    %48 = arith.addf %46, %47 : vector<8x1x128xf32>
    %c0_20 = arith.constant 0 : index
    %c0_21 = arith.constant 0 : index
    %c0_22 = arith.constant 0 : index
    %c0_23 = arith.constant 0 : index
    %49 = vector.load %arg9[%c0_20, %c0_21, %c0_22, %c0_23] : memref<5x8x1x128xf32, #tpu.memory_space<vmem>>, vector<1x8x1x128xf32>
    %50 = vector.shape_cast %49 : vector<1x8x1x128xf32> to vector<8x1x128xf32>
    %51 = vector.shape_cast %48 : vector<8x1x128xf32> to vector<1x8x1x128xf32>
    tpu.vector_store %arg9[%c0_20, %c0_21, %c0_22, %c0_23], %51 {strides = array<i32>} : memref<5x8x1x128xf32, #tpu.memory_space<vmem>>, vector<1x8x1x128xf32>,
    %52 = vector.broadcast %1 : f32 to vector<8x1x128xf32>
    %53 = arith.mulf %44, %52 : vector<8x1x128xf32>
    %54 = vector.broadcast %31 : f32 to vector<8x1x128xf32>
    %55 = arith.addf %53, %54 : vector<8x1x128xf32>
    %c1_24 = arith.constant 1 : index
    %c0_25 = arith.constant 0 : index
    %c0_26 = arith.constant 0 : index
    %c0_27 = arith.constant 0 : index
    %56 = vector.load %arg9[%c1_24, %c0_25, %c0_26, %c0_27] : memref<5x8x1x128xf32, #tpu.memory_space<vmem>>, vector<1x8x1x128xf32>
    %57 = vector.shape_cast %56 : vector<1x8x1x128xf32> to vector<8x1x128xf32>
    %58 = vector.shape_cast %55 : vector<8x1x128xf32> to vector<1x8x1x128xf32>
    tpu.vector_store %arg9[%c1_24, %c0_25, %c0_26, %c0_27], %58 {strides = array<i32>} : memref<5x8x1x128xf32, #tpu.memory_space<vmem>>, vector<1x8x1x128xf32>,
    %59 = vector.broadcast %2 : f32 to vector<8x1x128xf32>
    %60 = arith.mulf %44, %59 : vector<8x1x128xf32>
    %61 = vector.broadcast %32 : f32 to vector<8x1x128xf32>
    %62 = arith.addf %60, %61 : vector<8x1x128xf32>
    %c2_28 = arith.constant 2 : index
    %c0_29 = arith.constant 0 : index
    %c0_30 = arith.constant 0 : index
    %c0_31 = arith.constant 0 : index
    %63 = vector.load %arg9[%c2_28, %c0_29, %c0_30, %c0_31] : memref<5x8x1x128xf32, #tpu.memory_space<vmem>>, vector<1x8x1x128xf32>
    %64 = vector.shape_cast %63 : vector<1x8x1x128xf32> to vector<8x1x128xf32>
    %65 = vector.shape_cast %62 : vector<8x1x128xf32> to vector<1x8x1x128xf32>
    tpu.vector_store %arg9[%c2_28, %c0_29, %c0_30, %c0_31], %65 {strides = array<i32>} : memref<5x8x1x128xf32, #tpu.memory_space<vmem>>, vector<1x8x1x128xf32>,
    %66 = vector.broadcast %3 : f32 to vector<8x1x128xf32>
    %67 = arith.mulf %44, %66 : vector<8x1x128xf32>
    %68 = vector.broadcast %33 : f32 to vector<8x1x128xf32>
    %69 = arith.addf %67, %68 : vector<8x1x128xf32>
    %c3_32 = arith.constant 3 : index
    %c0_33 = arith.constant 0 : index
    %c0_34 = arith.constant 0 : index
    %c0_35 = arith.constant 0 : index
    %70 = vector.load %arg9[%c3_32, %c0_33, %c0_34, %c0_35] : memref<5x8x1x128xf32, #tpu.memory_space<vmem>>, vector<1x8x1x128xf32>
    %71 = vector.shape_cast %70 : vector<1x8x1x128xf32> to vector<8x1x128xf32>
    %72 = vector.shape_cast %69 : vector<8x1x128xf32> to vector<1x8x1x128xf32>
    tpu.vector_store %arg9[%c3_32, %c0_33, %c0_34, %c0_35], %72 {strides = array<i32>} : memref<5x8x1x128xf32, #tpu.memory_space<vmem>>, vector<1x8x1x128xf32>,
    %73 = vector.broadcast %4 : f32 to vector<8x1x128xf32>
    %74 = arith.mulf %44, %73 : vector<8x1x128xf32>
    %75 = vector.broadcast %34 : f32 to vector<8x1x128xf32>
    %76 = arith.addf %74, %75 : vector<8x1x128xf32>
    %c4_36 = arith.constant 4 : index
    %c0_37 = arith.constant 0 : index
    %c0_38 = arith.constant 0 : index
    %c0_39 = arith.constant 0 : index
    %77 = vector.load %arg9[%c4_36, %c0_37, %c0_38, %c0_39] : memref<5x8x1x128xf32, #tpu.memory_space<vmem>>, vector<1x8x1x128xf32>
    %78 = vector.shape_cast %77 : vector<1x8x1x128xf32> to vector<8x1x128xf32>
    %79 = vector.shape_cast %76 : vector<8x1x128xf32> to vector<1x8x1x128xf32>
    tpu.vector_store %arg9[%c4_36, %c0_37, %c0_38, %c0_39], %79 {strides = array<i32>} : memref<5x8x1x128xf32, #tpu.memory_space<vmem>>, vector<1x8x1x128xf32>,
    %c0_40 = arith.constant 0 : index
    %c0_41 = arith.constant 0 : index
    %c0_42 = arith.constant 0 : index
    %80 = vector.load %arg10[%c0_40, %c0_41, %c0_42] : memref<5x1x128xf32, #tpu.memory_space<vmem>>, vector<1x1x128xf32>
    %81 = vector.shape_cast %80 : vector<1x1x128xf32> to vector<1x128xf32>
    %c1_43 = arith.constant 1 : index
    %c0_44 = arith.constant 0 : index
    %c0_45 = arith.constant 0 : index
    %82 = vector.load %arg10[%c1_43, %c0_44, %c0_45] : memref<5x1x128xf32, #tpu.memory_space<vmem>>, vector<1x1x128xf32>
    %83 = vector.shape_cast %82 : vector<1x1x128xf32> to vector<1x128xf32>
    %c2_46 = arith.constant 2 : index
    %c0_47 = arith.constant 0 : index
    %c0_48 = arith.constant 0 : index
    %84 = vector.load %arg10[%c2_46, %c0_47, %c0_48] : memref<5x1x128xf32, #tpu.memory_space<vmem>>, vector<1x1x128xf32>
    %85 = vector.shape_cast %84 : vector<1x1x128xf32> to vector<1x128xf32>
    %c3_49 = arith.constant 3 : index
    %c0_50 = arith.constant 0 : index
    %c0_51 = arith.constant 0 : index
    %86 = vector.load %arg10[%c3_49, %c0_50, %c0_51] : memref<5x1x128xf32, #tpu.memory_space<vmem>>, vector<1x1x128xf32>
    %87 = vector.shape_cast %86 : vector<1x1x128xf32> to vector<1x128xf32>
    %c4_52 = arith.constant 4 : index
    %c0_53 = arith.constant 0 : index
    %c0_54 = arith.constant 0 : index
    %88 = vector.load %arg10[%c4_52, %c0_53, %c0_54] : memref<5x1x128xf32, #tpu.memory_space<vmem>>, vector<1x1x128xf32>
    %89 = vector.shape_cast %88 : vector<1x1x128xf32> to vector<1x128xf32>
    %c0_i32_55 = arith.constant 0 : i32
    %c0_56 = arith.constant 0 : index
    %90 = arith.index_cast %c0_i32_55 : i32 to index
    %c0_57 = arith.constant 0 : index
    %c0_58 = arith.constant 0 : index
    %91 = vector.load %arg9[%c0_56, %90, %c0_57, %c0_58] : memref<5x8x1x128xf32, #tpu.memory_space<vmem>>, vector<1x1x1x128xf32>
    %92 = vector.shape_cast %91 : vector<1x1x1x128xf32> to vector<1x128xf32>
    %93 = vector.broadcast %5 : f32 to vector<1x128xf32>
    %94 = arith.mulf %81, %93 : vector<1x128xf32>
    %95 = vector.broadcast %6 : f32 to vector<1x128xf32>
    %96 = arith.mulf %83, %95 : vector<1x128xf32>
    %97 = vector.broadcast %7 : f32 to vector<1x128xf32>
    %98 = arith.mulf %85, %97 : vector<1x128xf32>
    %99 = vector.broadcast %8 : f32 to vector<1x128xf32>
    %100 = arith.mulf %87, %99 : vector<1x128xf32>
    %101 = vector.broadcast %9 : f32 to vector<1x128xf32>
    %102 = arith.mulf %89, %101 : vector<1x128xf32>
    %103 = arith.addf %92, %94 : vector<1x128xf32>
    %104 = arith.addf %96, %98 : vector<1x128xf32>
    %105 = arith.addf %100, %102 : vector<1x128xf32>
    %106 = arith.addf %103, %104 : vector<1x128xf32>
    %107 = arith.addf %106, %105 : vector<1x128xf32>
    %108 = math.tanh %107 : vector<1x128xf32>
    %c1_59 = arith.constant 1 : index
    %109 = arith.index_cast %c0_i32_55 : i32 to index
    %c0_60 = arith.constant 0 : index
    %c0_61 = arith.constant 0 : index
    %110 = vector.load %arg9[%c1_59, %109, %c0_60, %c0_61] : memref<5x8x1x128xf32, #tpu.memory_space<vmem>>, vector<1x1x1x128xf32>
    %111 = vector.shape_cast %110 : vector<1x1x1x128xf32> to vector<1x128xf32>
    %112 = vector.broadcast %10 : f32 to vector<1x128xf32>
    %113 = arith.mulf %81, %112 : vector<1x128xf32>
    %114 = vector.broadcast %11 : f32 to vector<1x128xf32>
    %115 = arith.mulf %83, %114 : vector<1x128xf32>
    %116 = vector.broadcast %12 : f32 to vector<1x128xf32>
    %117 = arith.mulf %85, %116 : vector<1x128xf32>
    %118 = vector.broadcast %13 : f32 to vector<1x128xf32>
    %119 = arith.mulf %87, %118 : vector<1x128xf32>
    %120 = vector.broadcast %14 : f32 to vector<1x128xf32>
    %121 = arith.mulf %89, %120 : vector<1x128xf32>
    %122 = arith.addf %111, %113 : vector<1x128xf32>
    %123 = arith.addf %115, %117 : vector<1x128xf32>
    %124 = arith.addf %119, %121 : vector<1x128xf32>
    %125 = arith.addf %122, %123 : vector<1x128xf32>
    %126 = arith.addf %125, %124 : vector<1x128xf32>
    %127 = math.tanh %126 : vector<1x128xf32>
    %c2_62 = arith.constant 2 : index
    %128 = arith.index_cast %c0_i32_55 : i32 to index
    %c0_63 = arith.constant 0 : index
    %c0_64 = arith.constant 0 : index
    %129 = vector.load %arg9[%c2_62, %128, %c0_63, %c0_64] : memref<5x8x1x128xf32, #tpu.memory_space<vmem>>, vector<1x1x1x128xf32>
    %130 = vector.shape_cast %129 : vector<1x1x1x128xf32> to vector<1x128xf32>
    %131 = vector.broadcast %15 : f32 to vector<1x128xf32>
    %132 = arith.mulf %81, %131 : vector<1x128xf32>
    %133 = vector.broadcast %16 : f32 to vector<1x128xf32>
    %134 = arith.mulf %83, %133 : vector<1x128xf32>
    %135 = vector.broadcast %17 : f32 to vector<1x128xf32>
    %136 = arith.mulf %85, %135 : vector<1x128xf32>
    %137 = vector.broadcast %18 : f32 to vector<1x128xf32>
    %138 = arith.mulf %87, %137 : vector<1x128xf32>
    %139 = vector.broadcast %19 : f32 to vector<1x128xf32>
    %140 = arith.mulf %89, %139 : vector<1x128xf32>
    %141 = arith.addf %130, %132 : vector<1x128xf32>
    %142 = arith.addf %134, %136 : vector<1x128xf32>
    %143 = arith.addf %138, %140 : vector<1x128xf32>
    %144 = arith.addf %141, %142 : vector<1x128xf32>
    %145 = arith.addf %144, %143 : vector<1x128xf32>
    %146 = math.tanh %145 : vector<1x128xf32>
    %c3_65 = arith.constant 3 : index
    %147 = arith.index_cast %c0_i32_55 : i32 to index
    %c0_66 = arith.constant 0 : index
    %c0_67 = arith.constant 0 : index
    %148 = vector.load %arg9[%c3_65, %147, %c0_66, %c0_67] : memref<5x8x1x128xf32, #tpu.memory_space<vmem>>, vector<1x1x1x128xf32>
    %149 = vector.shape_cast %148 : vector<1x1x1x128xf32> to vector<1x128xf32>
    %150 = vector.broadcast %20 : f32 to vector<1x128xf32>
    %151 = arith.mulf %81, %150 : vector<1x128xf32>
    %152 = vector.broadcast %21 : f32 to vector<1x128xf32>
    %153 = arith.mulf %83, %152 : vector<1x128xf32>
    %154 = vector.broadcast %22 : f32 to vector<1x128xf32>
    %155 = arith.mulf %85, %154 : vector<1x128xf32>
    %156 = vector.broadcast %23 : f32 to vector<1x128xf32>
    %157 = arith.mulf %87, %156 : vector<1x128xf32>
    %158 = vector.broadcast %24 : f32 to vector<1x128xf32>
    %159 = arith.mulf %89, %158 : vector<1x128xf32>
    %160 = arith.addf %149, %151 : vector<1x128xf32>
    %161 = arith.addf %153, %155 : vector<1x128xf32>
    %162 = arith.addf %157, %159 : vector<1x128xf32>
    %163 = arith.addf %160, %161 : vector<1x128xf32>
    %164 = arith.addf %163, %162 : vector<1x128xf32>
    %165 = math.tanh %164 : vector<1x128xf32>
    %c4_68 = arith.constant 4 : index
    %166 = arith.index_cast %c0_i32_55 : i32 to index
    %c0_69 = arith.constant 0 : index
    %c0_70 = arith.constant 0 : index
    %167 = vector.load %arg9[%c4_68, %166, %c0_69, %c0_70] : memref<5x8x1x128xf32, #tpu.memory_space<vmem>>, vector<1x1x1x128xf32>
    %168 = vector.shape_cast %167 : vector<1x1x1x128xf32> to vector<1x128xf32>
    %169 = vector.broadcast %25 : f32 to vector<1x128xf32>
    %170 = arith.mulf %81, %169 : vector<1x128xf32>
    %171 = vector.broadcast %26 : f32 to vector<1x128xf32>
    %172 = arith.mulf %83, %171 : vector<1x128xf32>
    %173 = vector.broadcast %27 : f32 to vector<1x128xf32>
    %174 = arith.mulf %85, %173 : vector<1x128xf32>
    %175 = vector.broadcast %28 : f32 to vector<1x128xf32>
    %176 = arith.mulf %87, %175 : vector<1x128xf32>
    %177 = vector.broadcast %29 : f32 to vector<1x128xf32>
    %178 = arith.mulf %89, %177 : vector<1x128xf32>
    %179 = arith.addf %168, %170 : vector<1x128xf32>
    %180 = arith.addf %172, %174 : vector<1x128xf32>
    %181 = arith.addf %176, %178 : vector<1x128xf32>
    %182 = arith.addf %179, %180 : vector<1x128xf32>
    %183 = arith.addf %182, %181 : vector<1x128xf32>
    %184 = math.tanh %183 : vector<1x128xf32>
    %c1_i32 = arith.constant 1 : i32
    %c0_71 = arith.constant 0 : index
    %185 = arith.index_cast %c1_i32 : i32 to index
    %c0_72 = arith.constant 0 : index
    %c0_73 = arith.constant 0 : index
    %186 = vector.load %arg9[%c0_71, %185, %c0_72, %c0_73] : memref<5x8x1x128xf32, #tpu.memory_space<vmem>>, vector<1x1x1x128xf32>
    %187 = vector.shape_cast %186 : vector<1x1x1x128xf32> to vector<1x128xf32>
    %188 = vector.broadcast %5 : f32 to vector<1x128xf32>
    %189 = arith.mulf %108, %188 : vector<1x128xf32>
    %190 = vector.broadcast %6 : f32 to vector<1x128xf32>
    %191 = arith.mulf %127, %190 : vector<1x128xf32>
    %192 = vector.broadcast %7 : f32 to vector<1x128xf32>
    %193 = arith.mulf %146, %192 : vector<1x128xf32>
    %194 = vector.broadcast %8 : f32 to vector<1x128xf32>
    %195 = arith.mulf %165, %194 : vector<1x128xf32>
    %196 = vector.broadcast %9 : f32 to vector<1x128xf32>
    %197 = arith.mulf %184, %196 : vector<1x128xf32>
    %198 = arith.addf %187, %189 : vector<1x128xf32>
    %199 = arith.addf %191, %193 : vector<1x128xf32>
    %200 = arith.addf %195, %197 : vector<1x128xf32>
    %201 = arith.addf %198, %199 : vector<1x128xf32>
    %202 = arith.addf %201, %200 : vector<1x128xf32>
    %203 = math.tanh %202 : vector<1x128xf32>
    %c1_74 = arith.constant 1 : index
    %204 = arith.index_cast %c1_i32 : i32 to index
    %c0_75 = arith.constant 0 : index
    %c0_76 = arith.constant 0 : index
    %205 = vector.load %arg9[%c1_74, %204, %c0_75, %c0_76] : memref<5x8x1x128xf32, #tpu.memory_space<vmem>>, vector<1x1x1x128xf32>
    %206 = vector.shape_cast %205 : vector<1x1x1x128xf32> to vector<1x128xf32>
    %207 = vector.broadcast %10 : f32 to vector<1x128xf32>
    %208 = arith.mulf %108, %207 : vector<1x128xf32>
    %209 = vector.broadcast %11 : f32 to vector<1x128xf32>
    %210 = arith.mulf %127, %209 : vector<1x128xf32>
    %211 = vector.broadcast %12 : f32 to vector<1x128xf32>
    %212 = arith.mulf %146, %211 : vector<1x128xf32>
    %213 = vector.broadcast %13 : f32 to vector<1x128xf32>
    %214 = arith.mulf %165, %213 : vector<1x128xf32>
    %215 = vector.broadcast %14 : f32 to vector<1x128xf32>
    %216 = arith.mulf %184, %215 : vector<1x128xf32>
    %217 = arith.addf %206, %208 : vector<1x128xf32>
    %218 = arith.addf %210, %212 : vector<1x128xf32>
    %219 = arith.addf %214, %216 : vector<1x128xf32>
    %220 = arith.addf %217, %218 : vector<1x128xf32>
    %221 = arith.addf %220, %219 : vector<1x128xf32>
    %222 = math.tanh %221 : vector<1x128xf32>
    %c2_77 = arith.constant 2 : index
    %223 = arith.index_cast %c1_i32 : i32 to index
    %c0_78 = arith.constant 0 : index
    %c0_79 = arith.constant 0 : index
    %224 = vector.load %arg9[%c2_77, %223, %c0_78, %c0_79] : memref<5x8x1x128xf32, #tpu.memory_space<vmem>>, vector<1x1x1x128xf32>
    %225 = vector.shape_cast %224 : vector<1x1x1x128xf32> to vector<1x128xf32>
    %226 = vector.broadcast %15 : f32 to vector<1x128xf32>
    %227 = arith.mulf %108, %226 : vector<1x128xf32>
    %228 = vector.broadcast %16 : f32 to vector<1x128xf32>
    %229 = arith.mulf %127, %228 : vector<1x128xf32>
    %230 = vector.broadcast %17 : f32 to vector<1x128xf32>
    %231 = arith.mulf %146, %230 : vector<1x128xf32>
    %232 = vector.broadcast %18 : f32 to vector<1x128xf32>
    %233 = arith.mulf %165, %232 : vector<1x128xf32>
    %234 = vector.broadcast %19 : f32 to vector<1x128xf32>
    %235 = arith.mulf %184, %234 : vector<1x128xf32>
    %236 = arith.addf %225, %227 : vector<1x128xf32>
    %237 = arith.addf %229, %231 : vector<1x128xf32>
    %238 = arith.addf %233, %235 : vector<1x128xf32>
    %239 = arith.addf %236, %237 : vector<1x128xf32>
    %240 = arith.addf %239, %238 : vector<1x128xf32>
    %241 = math.tanh %240 : vector<1x128xf32>
    %c3_80 = arith.constant 3 : index
    %242 = arith.index_cast %c1_i32 : i32 to index
    %c0_81 = arith.constant 0 : index
    %c0_82 = arith.constant 0 : index
    %243 = vector.load %arg9[%c3_80, %242, %c0_81, %c0_82] : memref<5x8x1x128xf32, #tpu.memory_space<vmem>>, vector<1x1x1x128xf32>
    %244 = vector.shape_cast %243 : vector<1x1x1x128xf32> to vector<1x128xf32>
    %245 = vector.broadcast %20 : f32 to vector<1x128xf32>
    %246 = arith.mulf %108, %245 : vector<1x128xf32>
    %247 = vector.broadcast %21 : f32 to vector<1x128xf32>
    %248 = arith.mulf %127, %247 : vector<1x128xf32>
    %249 = vector.broadcast %22 : f32 to vector<1x128xf32>
    %250 = arith.mulf %146, %249 : vector<1x128xf32>
    %251 = vector.broadcast %23 : f32 to vector<1x128xf32>
    %252 = arith.mulf %165, %251 : vector<1x128xf32>
    %253 = vector.broadcast %24 : f32 to vector<1x128xf32>
    %254 = arith.mulf %184, %253 : vector<1x128xf32>
    %255 = arith.addf %244, %246 : vector<1x128xf32>
    %256 = arith.addf %248, %250 : vector<1x128xf32>
    %257 = arith.addf %252, %254 : vector<1x128xf32>
    %258 = arith.addf %255, %256 : vector<1x128xf32>
    %259 = arith.addf %258, %257 : vector<1x128xf32>
    %260 = math.tanh %259 : vector<1x128xf32>
    %c4_83 = arith.constant 4 : index
    %261 = arith.index_cast %c1_i32 : i32 to index
    %c0_84 = arith.constant 0 : index
    %c0_85 = arith.constant 0 : index
    %262 = vector.load %arg9[%c4_83, %261, %c0_84, %c0_85] : memref<5x8x1x128xf32, #tpu.memory_space<vmem>>, vector<1x1x1x128xf32>
    %263 = vector.shape_cast %262 : vector<1x1x1x128xf32> to vector<1x128xf32>
    %264 = vector.broadcast %25 : f32 to vector<1x128xf32>
    %265 = arith.mulf %108, %264 : vector<1x128xf32>
    %266 = vector.broadcast %26 : f32 to vector<1x128xf32>
    %267 = arith.mulf %127, %266 : vector<1x128xf32>
    %268 = vector.broadcast %27 : f32 to vector<1x128xf32>
    %269 = arith.mulf %146, %268 : vector<1x128xf32>
    %270 = vector.broadcast %28 : f32 to vector<1x128xf32>
    %271 = arith.mulf %165, %270 : vector<1x128xf32>
    %272 = vector.broadcast %29 : f32 to vector<1x128xf32>
    %273 = arith.mulf %184, %272 : vector<1x128xf32>
    %274 = arith.addf %263, %265 : vector<1x128xf32>
    %275 = arith.addf %267, %269 : vector<1x128xf32>
    %276 = arith.addf %271, %273 : vector<1x128xf32>
    %277 = arith.addf %274, %275 : vector<1x128xf32>
    %278 = arith.addf %277, %276 : vector<1x128xf32>
    %279 = math.tanh %278 : vector<1x128xf32>
    %c2_i32 = arith.constant 2 : i32
    %c0_86 = arith.constant 0 : index
    %280 = arith.index_cast %c2_i32 : i32 to index
    %c0_87 = arith.constant 0 : index
    %c0_88 = arith.constant 0 : index
    %281 = vector.load %arg9[%c0_86, %280, %c0_87, %c0_88] : memref<5x8x1x128xf32, #tpu.memory_space<vmem>>, vector<1x1x1x128xf32>
    %282 = vector.shape_cast %281 : vector<1x1x1x128xf32> to vector<1x128xf32>
    %283 = vector.broadcast %5 : f32 to vector<1x128xf32>
    %284 = arith.mulf %203, %283 : vector<1x128xf32>
    %285 = vector.broadcast %6 : f32 to vector<1x128xf32>
    %286 = arith.mulf %222, %285 : vector<1x128xf32>
    %287 = vector.broadcast %7 : f32 to vector<1x128xf32>
    %288 = arith.mulf %241, %287 : vector<1x128xf32>
    %289 = vector.broadcast %8 : f32 to vector<1x128xf32>
    %290 = arith.mulf %260, %289 : vector<1x128xf32>
    %291 = vector.broadcast %9 : f32 to vector<1x128xf32>
    %292 = arith.mulf %279, %291 : vector<1x128xf32>
    %293 = arith.addf %282, %284 : vector<1x128xf32>
    %294 = arith.addf %286, %288 : vector<1x128xf32>
    %295 = arith.addf %290, %292 : vector<1x128xf32>
    %296 = arith.addf %293, %294 : vector<1x128xf32>
    %297 = arith.addf %296, %295 : vector<1x128xf32>
    %298 = math.tanh %297 : vector<1x128xf32>
    %c1_89 = arith.constant 1 : index
    %299 = arith.index_cast %c2_i32 : i32 to index
    %c0_90 = arith.constant 0 : index
    %c0_91 = arith.constant 0 : index
    %300 = vector.load %arg9[%c1_89, %299, %c0_90, %c0_91] : memref<5x8x1x128xf32, #tpu.memory_space<vmem>>, vector<1x1x1x128xf32>
    %301 = vector.shape_cast %300 : vector<1x1x1x128xf32> to vector<1x128xf32>
    %302 = vector.broadcast %10 : f32 to vector<1x128xf32>
    %303 = arith.mulf %203, %302 : vector<1x128xf32>
    %304 = vector.broadcast %11 : f32 to vector<1x128xf32>
    %305 = arith.mulf %222, %304 : vector<1x128xf32>
    %306 = vector.broadcast %12 : f32 to vector<1x128xf32>
    %307 = arith.mulf %241, %306 : vector<1x128xf32>
    %308 = vector.broadcast %13 : f32 to vector<1x128xf32>
    %309 = arith.mulf %260, %308 : vector<1x128xf32>
    %310 = vector.broadcast %14 : f32 to vector<1x128xf32>
    %311 = arith.mulf %279, %310 : vector<1x128xf32>
    %312 = arith.addf %301, %303 : vector<1x128xf32>
    %313 = arith.addf %305, %307 : vector<1x128xf32>
    %314 = arith.addf %309, %311 : vector<1x128xf32>
    %315 = arith.addf %312, %313 : vector<1x128xf32>
    %316 = arith.addf %315, %314 : vector<1x128xf32>
    %317 = math.tanh %316 : vector<1x128xf32>
    %c2_92 = arith.constant 2 : index
    %318 = arith.index_cast %c2_i32 : i32 to index
    %c0_93 = arith.constant 0 : index
    %c0_94 = arith.constant 0 : index
    %319 = vector.load %arg9[%c2_92, %318, %c0_93, %c0_94] : memref<5x8x1x128xf32, #tpu.memory_space<vmem>>, vector<1x1x1x128xf32>
    %320 = vector.shape_cast %319 : vector<1x1x1x128xf32> to vector<1x128xf32>
    %321 = vector.broadcast %15 : f32 to vector<1x128xf32>
    %322 = arith.mulf %203, %321 : vector<1x128xf32>
    %323 = vector.broadcast %16 : f32 to vector<1x128xf32>
    %324 = arith.mulf %222, %323 : vector<1x128xf32>
    %325 = vector.broadcast %17 : f32 to vector<1x128xf32>
    %326 = arith.mulf %241, %325 : vector<1x128xf32>
    %327 = vector.broadcast %18 : f32 to vector<1x128xf32>
    %328 = arith.mulf %260, %327 : vector<1x128xf32>
    %329 = vector.broadcast %19 : f32 to vector<1x128xf32>
    %330 = arith.mulf %279, %329 : vector<1x128xf32>
    %331 = arith.addf %320, %322 : vector<1x128xf32>
    %332 = arith.addf %324, %326 : vector<1x128xf32>
    %333 = arith.addf %328, %330 : vector<1x128xf32>
    %334 = arith.addf %331, %332 : vector<1x128xf32>
    %335 = arith.addf %334, %333 : vector<1x128xf32>
    %336 = math.tanh %335 : vector<1x128xf32>
    %c3_95 = arith.constant 3 : index
    %337 = arith.index_cast %c2_i32 : i32 to index
    %c0_96 = arith.constant 0 : index
    %c0_97 = arith.constant 0 : index
    %338 = vector.load %arg9[%c3_95, %337, %c0_96, %c0_97] : memref<5x8x1x128xf32, #tpu.memory_space<vmem>>, vector<1x1x1x128xf32>
    %339 = vector.shape_cast %338 : vector<1x1x1x128xf32> to vector<1x128xf32>
    %340 = vector.broadcast %20 : f32 to vector<1x128xf32>
    %341 = arith.mulf %203, %340 : vector<1x128xf32>
    %342 = vector.broadcast %21 : f32 to vector<1x128xf32>
    %343 = arith.mulf %222, %342 : vector<1x128xf32>
    %344 = vector.broadcast %22 : f32 to vector<1x128xf32>
    %345 = arith.mulf %241, %344 : vector<1x128xf32>
    %346 = vector.broadcast %23 : f32 to vector<1x128xf32>
    %347 = arith.mulf %260, %346 : vector<1x128xf32>
    %348 = vector.broadcast %24 : f32 to vector<1x128xf32>
    %349 = arith.mulf %279, %348 : vector<1x128xf32>
    %350 = arith.addf %339, %341 : vector<1x128xf32>
    %351 = arith.addf %343, %345 : vector<1x128xf32>
    %352 = arith.addf %347, %349 : vector<1x128xf32>
    %353 = arith.addf %350, %351 : vector<1x128xf32>
    %354 = arith.addf %353, %352 : vector<1x128xf32>
    %355 = math.tanh %354 : vector<1x128xf32>
    %c4_98 = arith.constant 4 : index
    %356 = arith.index_cast %c2_i32 : i32 to index
    %c0_99 = arith.constant 0 : index
    %c0_100 = arith.constant 0 : index
    %357 = vector.load %arg9[%c4_98, %356, %c0_99, %c0_100] : memref<5x8x1x128xf32, #tpu.memory_space<vmem>>, vector<1x1x1x128xf32>
    %358 = vector.shape_cast %357 : vector<1x1x1x128xf32> to vector<1x128xf32>
    %359 = vector.broadcast %25 : f32 to vector<1x128xf32>
    %360 = arith.mulf %203, %359 : vector<1x128xf32>
    %361 = vector.broadcast %26 : f32 to vector<1x128xf32>
    %362 = arith.mulf %222, %361 : vector<1x128xf32>
    %363 = vector.broadcast %27 : f32 to vector<1x128xf32>
    %364 = arith.mulf %241, %363 : vector<1x128xf32>
    %365 = vector.broadcast %28 : f32 to vector<1x128xf32>
    %366 = arith.mulf %260, %365 : vector<1x128xf32>
    %367 = vector.broadcast %29 : f32 to vector<1x128xf32>
    %368 = arith.mulf %279, %367 : vector<1x128xf32>
    %369 = arith.addf %358, %360 : vector<1x128xf32>
    %370 = arith.addf %362, %364 : vector<1x128xf32>
    %371 = arith.addf %366, %368 : vector<1x128xf32>
    %372 = arith.addf %369, %370 : vector<1x128xf32>
    %373 = arith.addf %372, %371 : vector<1x128xf32>
    %374 = math.tanh %373 : vector<1x128xf32>
    %c3_i32 = arith.constant 3 : i32
    %c0_101 = arith.constant 0 : index
    %375 = arith.index_cast %c3_i32 : i32 to index
    %c0_102 = arith.constant 0 : index
    %c0_103 = arith.constant 0 : index
    %376 = vector.load %arg9[%c0_101, %375, %c0_102, %c0_103] : memref<5x8x1x128xf32, #tpu.memory_space<vmem>>, vector<1x1x1x128xf32>
    %377 = vector.shape_cast %376 : vector<1x1x1x128xf32> to vector<1x128xf32>
    %378 = vector.broadcast %5 : f32 to vector<1x128xf32>
    %379 = arith.mulf %298, %378 : vector<1x128xf32>
    %380 = vector.broadcast %6 : f32 to vector<1x128xf32>
    %381 = arith.mulf %317, %380 : vector<1x128xf32>
    %382 = vector.broadcast %7 : f32 to vector<1x128xf32>
    %383 = arith.mulf %336, %382 : vector<1x128xf32>
    %384 = vector.broadcast %8 : f32 to vector<1x128xf32>
    %385 = arith.mulf %355, %384 : vector<1x128xf32>
    %386 = vector.broadcast %9 : f32 to vector<1x128xf32>
    %387 = arith.mulf %374, %386 : vector<1x128xf32>
    %388 = arith.addf %377, %379 : vector<1x128xf32>
    %389 = arith.addf %381, %383 : vector<1x128xf32>
    %390 = arith.addf %385, %387 : vector<1x128xf32>
    %391 = arith.addf %388, %389 : vector<1x128xf32>
    %392 = arith.addf %391, %390 : vector<1x128xf32>
    %393 = math.tanh %392 : vector<1x128xf32>
    %c1_104 = arith.constant 1 : index
    %394 = arith.index_cast %c3_i32 : i32 to index
    %c0_105 = arith.constant 0 : index
    %c0_106 = arith.constant 0 : index
    %395 = vector.load %arg9[%c1_104, %394, %c0_105, %c0_106] : memref<5x8x1x128xf32, #tpu.memory_space<vmem>>, vector<1x1x1x128xf32>
    %396 = vector.shape_cast %395 : vector<1x1x1x128xf32> to vector<1x128xf32>
    %397 = vector.broadcast %10 : f32 to vector<1x128xf32>
    %398 = arith.mulf %298, %397 : vector<1x128xf32>
    %399 = vector.broadcast %11 : f32 to vector<1x128xf32>
    %400 = arith.mulf %317, %399 : vector<1x128xf32>
    %401 = vector.broadcast %12 : f32 to vector<1x128xf32>
    %402 = arith.mulf %336, %401 : vector<1x128xf32>
    %403 = vector.broadcast %13 : f32 to vector<1x128xf32>
    %404 = arith.mulf %355, %403 : vector<1x128xf32>
    %405 = vector.broadcast %14 : f32 to vector<1x128xf32>
    %406 = arith.mulf %374, %405 : vector<1x128xf32>
    %407 = arith.addf %396, %398 : vector<1x128xf32>
    %408 = arith.addf %400, %402 : vector<1x128xf32>
    %409 = arith.addf %404, %406 : vector<1x128xf32>
    %410 = arith.addf %407, %408 : vector<1x128xf32>
    %411 = arith.addf %410, %409 : vector<1x128xf32>
    %412 = math.tanh %411 : vector<1x128xf32>
    %c2_107 = arith.constant 2 : index
    %413 = arith.index_cast %c3_i32 : i32 to index
    %c0_108 = arith.constant 0 : index
    %c0_109 = arith.constant 0 : index
    %414 = vector.load %arg9[%c2_107, %413, %c0_108, %c0_109] : memref<5x8x1x128xf32, #tpu.memory_space<vmem>>, vector<1x1x1x128xf32>
    %415 = vector.shape_cast %414 : vector<1x1x1x128xf32> to vector<1x128xf32>
    %416 = vector.broadcast %15 : f32 to vector<1x128xf32>
    %417 = arith.mulf %298, %416 : vector<1x128xf32>
    %418 = vector.broadcast %16 : f32 to vector<1x128xf32>
    %419 = arith.mulf %317, %418 : vector<1x128xf32>
    %420 = vector.broadcast %17 : f32 to vector<1x128xf32>
    %421 = arith.mulf %336, %420 : vector<1x128xf32>
    %422 = vector.broadcast %18 : f32 to vector<1x128xf32>
    %423 = arith.mulf %355, %422 : vector<1x128xf32>
    %424 = vector.broadcast %19 : f32 to vector<1x128xf32>
    %425 = arith.mulf %374, %424 : vector<1x128xf32>
    %426 = arith.addf %415, %417 : vector<1x128xf32>
    %427 = arith.addf %419, %421 : vector<1x128xf32>
    %428 = arith.addf %423, %425 : vector<1x128xf32>
    %429 = arith.addf %426, %427 : vector<1x128xf32>
    %430 = arith.addf %429, %428 : vector<1x128xf32>
    %431 = math.tanh %430 : vector<1x128xf32>
    %c3_110 = arith.constant 3 : index
    %432 = arith.index_cast %c3_i32 : i32 to index
    %c0_111 = arith.constant 0 : index
    %c0_112 = arith.constant 0 : index
    %433 = vector.load %arg9[%c3_110, %432, %c0_111, %c0_112] : memref<5x8x1x128xf32, #tpu.memory_space<vmem>>, vector<1x1x1x128xf32>
    %434 = vector.shape_cast %433 : vector<1x1x1x128xf32> to vector<1x128xf32>
    %435 = vector.broadcast %20 : f32 to vector<1x128xf32>
    %436 = arith.mulf %298, %435 : vector<1x128xf32>
    %437 = vector.broadcast %21 : f32 to vector<1x128xf32>
    %438 = arith.mulf %317, %437 : vector<1x128xf32>
    %439 = vector.broadcast %22 : f32 to vector<1x128xf32>
    %440 = arith.mulf %336, %439 : vector<1x128xf32>
    %441 = vector.broadcast %23 : f32 to vector<1x128xf32>
    %442 = arith.mulf %355, %441 : vector<1x128xf32>
    %443 = vector.broadcast %24 : f32 to vector<1x128xf32>
    %444 = arith.mulf %374, %443 : vector<1x128xf32>
    %445 = arith.addf %434, %436 : vector<1x128xf32>
    %446 = arith.addf %438, %440 : vector<1x128xf32>
    %447 = arith.addf %442, %444 : vector<1x128xf32>
    %448 = arith.addf %445, %446 : vector<1x128xf32>
    %449 = arith.addf %448, %447 : vector<1x128xf32>
    %450 = math.tanh %449 : vector<1x128xf32>
    %c4_113 = arith.constant 4 : index
    %451 = arith.index_cast %c3_i32 : i32 to index
    %c0_114 = arith.constant 0 : index
    %c0_115 = arith.constant 0 : index
    %452 = vector.load %arg9[%c4_113, %451, %c0_114, %c0_115] : memref<5x8x1x128xf32, #tpu.memory_space<vmem>>, vector<1x1x1x128xf32>
    %453 = vector.shape_cast %452 : vector<1x1x1x128xf32> to vector<1x128xf32>
    %454 = vector.broadcast %25 : f32 to vector<1x128xf32>
    %455 = arith.mulf %298, %454 : vector<1x128xf32>
    %456 = vector.broadcast %26 : f32 to vector<1x128xf32>
    %457 = arith.mulf %317, %456 : vector<1x128xf32>
    %458 = vector.broadcast %27 : f32 to vector<1x128xf32>
    %459 = arith.mulf %336, %458 : vector<1x128xf32>
    %460 = vector.broadcast %28 : f32 to vector<1x128xf32>
    %461 = arith.mulf %355, %460 : vector<1x128xf32>
    %462 = vector.broadcast %29 : f32 to vector<1x128xf32>
    %463 = arith.mulf %374, %462 : vector<1x128xf32>
    %464 = arith.addf %453, %455 : vector<1x128xf32>
    %465 = arith.addf %457, %459 : vector<1x128xf32>
    %466 = arith.addf %461, %463 : vector<1x128xf32>
    %467 = arith.addf %464, %465 : vector<1x128xf32>
    %468 = arith.addf %467, %466 : vector<1x128xf32>
    %469 = math.tanh %468 : vector<1x128xf32>
    %c4_i32 = arith.constant 4 : i32
    %c0_116 = arith.constant 0 : index
    %470 = arith.index_cast %c4_i32 : i32 to index
    %c0_117 = arith.constant 0 : index
    %c0_118 = arith.constant 0 : index
    %471 = vector.load %arg9[%c0_116, %470, %c0_117, %c0_118] : memref<5x8x1x128xf32, #tpu.memory_space<vmem>>, vector<1x1x1x128xf32>
    %472 = vector.shape_cast %471 : vector<1x1x1x128xf32> to vector<1x128xf32>
    %473 = vector.broadcast %5 : f32 to vector<1x128xf32>
    %474 = arith.mulf %393, %473 : vector<1x128xf32>
    %475 = vector.broadcast %6 : f32 to vector<1x128xf32>
    %476 = arith.mulf %412, %475 : vector<1x128xf32>
    %477 = vector.broadcast %7 : f32 to vector<1x128xf32>
    %478 = arith.mulf %431, %477 : vector<1x128xf32>
    %479 = vector.broadcast %8 : f32 to vector<1x128xf32>
    %480 = arith.mulf %450, %479 : vector<1x128xf32>
    %481 = vector.broadcast %9 : f32 to vector<1x128xf32>
    %482 = arith.mulf %469, %481 : vector<1x128xf32>
    %483 = arith.addf %472, %474 : vector<1x128xf32>
    %484 = arith.addf %476, %478 : vector<1x128xf32>
    %485 = arith.addf %480, %482 : vector<1x128xf32>
    %486 = arith.addf %483, %484 : vector<1x128xf32>
    %487 = arith.addf %486, %485 : vector<1x128xf32>
    %488 = math.tanh %487 : vector<1x128xf32>
    %c1_119 = arith.constant 1 : index
    %489 = arith.index_cast %c4_i32 : i32 to index
    %c0_120 = arith.constant 0 : index
    %c0_121 = arith.constant 0 : index
    %490 = vector.load %arg9[%c1_119, %489, %c0_120, %c0_121] : memref<5x8x1x128xf32, #tpu.memory_space<vmem>>, vector<1x1x1x128xf32>
    %491 = vector.shape_cast %490 : vector<1x1x1x128xf32> to vector<1x128xf32>
    %492 = vector.broadcast %10 : f32 to vector<1x128xf32>
    %493 = arith.mulf %393, %492 : vector<1x128xf32>
    %494 = vector.broadcast %11 : f32 to vector<1x128xf32>
    %495 = arith.mulf %412, %494 : vector<1x128xf32>
    %496 = vector.broadcast %12 : f32 to vector<1x128xf32>
    %497 = arith.mulf %431, %496 : vector<1x128xf32>
    %498 = vector.broadcast %13 : f32 to vector<1x128xf32>
    %499 = arith.mulf %450, %498 : vector<1x128xf32>
    %500 = vector.broadcast %14 : f32 to vector<1x128xf32>
    %501 = arith.mulf %469, %500 : vector<1x128xf32>
    %502 = arith.addf %491, %493 : vector<1x128xf32>
    %503 = arith.addf %495, %497 : vector<1x128xf32>
    %504 = arith.addf %499, %501 : vector<1x128xf32>
    %505 = arith.addf %502, %503 : vector<1x128xf32>
    %506 = arith.addf %505, %504 : vector<1x128xf32>
    %507 = math.tanh %506 : vector<1x128xf32>
    %c2_122 = arith.constant 2 : index
    %508 = arith.index_cast %c4_i32 : i32 to index
    %c0_123 = arith.constant 0 : index
    %c0_124 = arith.constant 0 : index
    %509 = vector.load %arg9[%c2_122, %508, %c0_123, %c0_124] : memref<5x8x1x128xf32, #tpu.memory_space<vmem>>, vector<1x1x1x128xf32>
    %510 = vector.shape_cast %509 : vector<1x1x1x128xf32> to vector<1x128xf32>
    %511 = vector.broadcast %15 : f32 to vector<1x128xf32>
    %512 = arith.mulf %393, %511 : vector<1x128xf32>
    %513 = vector.broadcast %16 : f32 to vector<1x128xf32>
    %514 = arith.mulf %412, %513 : vector<1x128xf32>
    %515 = vector.broadcast %17 : f32 to vector<1x128xf32>
    %516 = arith.mulf %431, %515 : vector<1x128xf32>
    %517 = vector.broadcast %18 : f32 to vector<1x128xf32>
    %518 = arith.mulf %450, %517 : vector<1x128xf32>
    %519 = vector.broadcast %19 : f32 to vector<1x128xf32>
    %520 = arith.mulf %469, %519 : vector<1x128xf32>
    %521 = arith.addf %510, %512 : vector<1x128xf32>
    %522 = arith.addf %514, %516 : vector<1x128xf32>
    %523 = arith.addf %518, %520 : vector<1x128xf32>
    %524 = arith.addf %521, %522 : vector<1x128xf32>
    %525 = arith.addf %524, %523 : vector<1x128xf32>
    %526 = math.tanh %525 : vector<1x128xf32>
    %c3_125 = arith.constant 3 : index
    %527 = arith.index_cast %c4_i32 : i32 to index
    %c0_126 = arith.constant 0 : index
    %c0_127 = arith.constant 0 : index
    %528 = vector.load %arg9[%c3_125, %527, %c0_126, %c0_127] : memref<5x8x1x128xf32, #tpu.memory_space<vmem>>, vector<1x1x1x128xf32>
    %529 = vector.shape_cast %528 : vector<1x1x1x128xf32> to vector<1x128xf32>
    %530 = vector.broadcast %20 : f32 to vector<1x128xf32>
    %531 = arith.mulf %393, %530 : vector<1x128xf32>
    %532 = vector.broadcast %21 : f32 to vector<1x128xf32>
    %533 = arith.mulf %412, %532 : vector<1x128xf32>
    %534 = vector.broadcast %22 : f32 to vector<1x128xf32>
    %535 = arith.mulf %431, %534 : vector<1x128xf32>
    %536 = vector.broadcast %23 : f32 to vector<1x128xf32>
    %537 = arith.mulf %450, %536 : vector<1x128xf32>
    %538 = vector.broadcast %24 : f32 to vector<1x128xf32>
    %539 = arith.mulf %469, %538 : vector<1x128xf32>
    %540 = arith.addf %529, %531 : vector<1x128xf32>
    %541 = arith.addf %533, %535 : vector<1x128xf32>
    %542 = arith.addf %537, %539 : vector<1x128xf32>
    %543 = arith.addf %540, %541 : vector<1x128xf32>
    %544 = arith.addf %543, %542 : vector<1x128xf32>
    %545 = math.tanh %544 : vector<1x128xf32>
    %c4_128 = arith.constant 4 : index
    %546 = arith.index_cast %c4_i32 : i32 to index
    %c0_129 = arith.constant 0 : index
    %c0_130 = arith.constant 0 : index
    %547 = vector.load %arg9[%c4_128, %546, %c0_129, %c0_130] : memref<5x8x1x128xf32, #tpu.memory_space<vmem>>, vector<1x1x1x128xf32>
    %548 = vector.shape_cast %547 : vector<1x1x1x128xf32> to vector<1x128xf32>
    %549 = vector.broadcast %25 : f32 to vector<1x128xf32>
    %550 = arith.mulf %393, %549 : vector<1x128xf32>
    %551 = vector.broadcast %26 : f32 to vector<1x128xf32>
    %552 = arith.mulf %412, %551 : vector<1x128xf32>
    %553 = vector.broadcast %27 : f32 to vector<1x128xf32>
    %554 = arith.mulf %431, %553 : vector<1x128xf32>
    %555 = vector.broadcast %28 : f32 to vector<1x128xf32>
    %556 = arith.mulf %450, %555 : vector<1x128xf32>
    %557 = vector.broadcast %29 : f32 to vector<1x128xf32>
    %558 = arith.mulf %469, %557 : vector<1x128xf32>
    %559 = arith.addf %548, %550 : vector<1x128xf32>
    %560 = arith.addf %552, %554 : vector<1x128xf32>
    %561 = arith.addf %556, %558 : vector<1x128xf32>
    %562 = arith.addf %559, %560 : vector<1x128xf32>
    %563 = arith.addf %562, %561 : vector<1x128xf32>
    %564 = math.tanh %563 : vector<1x128xf32>
    %c5_i32 = arith.constant 5 : i32
    %c0_131 = arith.constant 0 : index
    %565 = arith.index_cast %c5_i32 : i32 to index
    %c0_132 = arith.constant 0 : index
    %c0_133 = arith.constant 0 : index
    %566 = vector.load %arg9[%c0_131, %565, %c0_132, %c0_133] : memref<5x8x1x128xf32, #tpu.memory_space<vmem>>, vector<1x1x1x128xf32>
    %567 = vector.shape_cast %566 : vector<1x1x1x128xf32> to vector<1x128xf32>
    %568 = vector.broadcast %5 : f32 to vector<1x128xf32>
    %569 = arith.mulf %488, %568 : vector<1x128xf32>
    %570 = vector.broadcast %6 : f32 to vector<1x128xf32>
    %571 = arith.mulf %507, %570 : vector<1x128xf32>
    %572 = vector.broadcast %7 : f32 to vector<1x128xf32>
    %573 = arith.mulf %526, %572 : vector<1x128xf32>
    %574 = vector.broadcast %8 : f32 to vector<1x128xf32>
    %575 = arith.mulf %545, %574 : vector<1x128xf32>
    %576 = vector.broadcast %9 : f32 to vector<1x128xf32>
    %577 = arith.mulf %564, %576 : vector<1x128xf32>
    %578 = arith.addf %567, %569 : vector<1x128xf32>
    %579 = arith.addf %571, %573 : vector<1x128xf32>
    %580 = arith.addf %575, %577 : vector<1x128xf32>
    %581 = arith.addf %578, %579 : vector<1x128xf32>
    %582 = arith.addf %581, %580 : vector<1x128xf32>
    %583 = math.tanh %582 : vector<1x128xf32>
    %c1_134 = arith.constant 1 : index
    %584 = arith.index_cast %c5_i32 : i32 to index
    %c0_135 = arith.constant 0 : index
    %c0_136 = arith.constant 0 : index
    %585 = vector.load %arg9[%c1_134, %584, %c0_135, %c0_136] : memref<5x8x1x128xf32, #tpu.memory_space<vmem>>, vector<1x1x1x128xf32>
    %586 = vector.shape_cast %585 : vector<1x1x1x128xf32> to vector<1x128xf32>
    %587 = vector.broadcast %10 : f32 to vector<1x128xf32>
    %588 = arith.mulf %488, %587 : vector<1x128xf32>
    %589 = vector.broadcast %11 : f32 to vector<1x128xf32>
    %590 = arith.mulf %507, %589 : vector<1x128xf32>
    %591 = vector.broadcast %12 : f32 to vector<1x128xf32>
    %592 = arith.mulf %526, %591 : vector<1x128xf32>
    %593 = vector.broadcast %13 : f32 to vector<1x128xf32>
    %594 = arith.mulf %545, %593 : vector<1x128xf32>
    %595 = vector.broadcast %14 : f32 to vector<1x128xf32>
    %596 = arith.mulf %564, %595 : vector<1x128xf32>
    %597 = arith.addf %586, %588 : vector<1x128xf32>
    %598 = arith.addf %590, %592 : vector<1x128xf32>
    %599 = arith.addf %594, %596 : vector<1x128xf32>
    %600 = arith.addf %597, %598 : vector<1x128xf32>
    %601 = arith.addf %600, %599 : vector<1x128xf32>
    %602 = math.tanh %601 : vector<1x128xf32>
    %c2_137 = arith.constant 2 : index
    %603 = arith.index_cast %c5_i32 : i32 to index
    %c0_138 = arith.constant 0 : index
    %c0_139 = arith.constant 0 : index
    %604 = vector.load %arg9[%c2_137, %603, %c0_138, %c0_139] : memref<5x8x1x128xf32, #tpu.memory_space<vmem>>, vector<1x1x1x128xf32>
    %605 = vector.shape_cast %604 : vector<1x1x1x128xf32> to vector<1x128xf32>
    %606 = vector.broadcast %15 : f32 to vector<1x128xf32>
    %607 = arith.mulf %488, %606 : vector<1x128xf32>
    %608 = vector.broadcast %16 : f32 to vector<1x128xf32>
    %609 = arith.mulf %507, %608 : vector<1x128xf32>
    %610 = vector.broadcast %17 : f32 to vector<1x128xf32>
    %611 = arith.mulf %526, %610 : vector<1x128xf32>
    %612 = vector.broadcast %18 : f32 to vector<1x128xf32>
    %613 = arith.mulf %545, %612 : vector<1x128xf32>
    %614 = vector.broadcast %19 : f32 to vector<1x128xf32>
    %615 = arith.mulf %564, %614 : vector<1x128xf32>
    %616 = arith.addf %605, %607 : vector<1x128xf32>
    %617 = arith.addf %609, %611 : vector<1x128xf32>
    %618 = arith.addf %613, %615 : vector<1x128xf32>
    %619 = arith.addf %616, %617 : vector<1x128xf32>
    %620 = arith.addf %619, %618 : vector<1x128xf32>
    %621 = math.tanh %620 : vector<1x128xf32>
    %c3_140 = arith.constant 3 : index
    %622 = arith.index_cast %c5_i32 : i32 to index
    %c0_141 = arith.constant 0 : index
    %c0_142 = arith.constant 0 : index
    %623 = vector.load %arg9[%c3_140, %622, %c0_141, %c0_142] : memref<5x8x1x128xf32, #tpu.memory_space<vmem>>, vector<1x1x1x128xf32>
    %624 = vector.shape_cast %623 : vector<1x1x1x128xf32> to vector<1x128xf32>
    %625 = vector.broadcast %20 : f32 to vector<1x128xf32>
    %626 = arith.mulf %488, %625 : vector<1x128xf32>
    %627 = vector.broadcast %21 : f32 to vector<1x128xf32>
    %628 = arith.mulf %507, %627 : vector<1x128xf32>
    %629 = vector.broadcast %22 : f32 to vector<1x128xf32>
    %630 = arith.mulf %526, %629 : vector<1x128xf32>
    %631 = vector.broadcast %23 : f32 to vector<1x128xf32>
    %632 = arith.mulf %545, %631 : vector<1x128xf32>
    %633 = vector.broadcast %24 : f32 to vector<1x128xf32>
    %634 = arith.mulf %564, %633 : vector<1x128xf32>
    %635 = arith.addf %624, %626 : vector<1x128xf32>
    %636 = arith.addf %628, %630 : vector<1x128xf32>
    %637 = arith.addf %632, %634 : vector<1x128xf32>
    %638 = arith.addf %635, %636 : vector<1x128xf32>
    %639 = arith.addf %638, %637 : vector<1x128xf32>
    %640 = math.tanh %639 : vector<1x128xf32>
    %c4_143 = arith.constant 4 : index
    %641 = arith.index_cast %c5_i32 : i32 to index
    %c0_144 = arith.constant 0 : index
    %c0_145 = arith.constant 0 : index
    %642 = vector.load %arg9[%c4_143, %641, %c0_144, %c0_145] : memref<5x8x1x128xf32, #tpu.memory_space<vmem>>, vector<1x1x1x128xf32>
    %643 = vector.shape_cast %642 : vector<1x1x1x128xf32> to vector<1x128xf32>
    %644 = vector.broadcast %25 : f32 to vector<1x128xf32>
    %645 = arith.mulf %488, %644 : vector<1x128xf32>
    %646 = vector.broadcast %26 : f32 to vector<1x128xf32>
    %647 = arith.mulf %507, %646 : vector<1x128xf32>
    %648 = vector.broadcast %27 : f32 to vector<1x128xf32>
    %649 = arith.mulf %526, %648 : vector<1x128xf32>
    %650 = vector.broadcast %28 : f32 to vector<1x128xf32>
    %651 = arith.mulf %545, %650 : vector<1x128xf32>
    %652 = vector.broadcast %29 : f32 to vector<1x128xf32>
    %653 = arith.mulf %564, %652 : vector<1x128xf32>
    %654 = arith.addf %643, %645 : vector<1x128xf32>
    %655 = arith.addf %647, %649 : vector<1x128xf32>
    %656 = arith.addf %651, %653 : vector<1x128xf32>
    %657 = arith.addf %654, %655 : vector<1x128xf32>
    %658 = arith.addf %657, %656 : vector<1x128xf32>
    %659 = math.tanh %658 : vector<1x128xf32>
    %c6_i32 = arith.constant 6 : i32
    %c0_146 = arith.constant 0 : index
    %660 = arith.index_cast %c6_i32 : i32 to index
    %c0_147 = arith.constant 0 : index
    %c0_148 = arith.constant 0 : index
    %661 = vector.load %arg9[%c0_146, %660, %c0_147, %c0_148] : memref<5x8x1x128xf32, #tpu.memory_space<vmem>>, vector<1x1x1x128xf32>
    %662 = vector.shape_cast %661 : vector<1x1x1x128xf32> to vector<1x128xf32>
    %663 = vector.broadcast %5 : f32 to vector<1x128xf32>
    %664 = arith.mulf %583, %663 : vector<1x128xf32>
    %665 = vector.broadcast %6 : f32 to vector<1x128xf32>
    %666 = arith.mulf %602, %665 : vector<1x128xf32>
    %667 = vector.broadcast %7 : f32 to vector<1x128xf32>
    %668 = arith.mulf %621, %667 : vector<1x128xf32>
    %669 = vector.broadcast %8 : f32 to vector<1x128xf32>
    %670 = arith.mulf %640, %669 : vector<1x128xf32>
    %671 = vector.broadcast %9 : f32 to vector<1x128xf32>
    %672 = arith.mulf %659, %671 : vector<1x128xf32>
    %673 = arith.addf %662, %664 : vector<1x128xf32>
    %674 = arith.addf %666, %668 : vector<1x128xf32>
    %675 = arith.addf %670, %672 : vector<1x128xf32>
    %676 = arith.addf %673, %674 : vector<1x128xf32>
    %677 = arith.addf %676, %675 : vector<1x128xf32>
    %678 = math.tanh %677 : vector<1x128xf32>
    %c1_149 = arith.constant 1 : index
    %679 = arith.index_cast %c6_i32 : i32 to index
    %c0_150 = arith.constant 0 : index
    %c0_151 = arith.constant 0 : index
    %680 = vector.load %arg9[%c1_149, %679, %c0_150, %c0_151] : memref<5x8x1x128xf32, #tpu.memory_space<vmem>>, vector<1x1x1x128xf32>
    %681 = vector.shape_cast %680 : vector<1x1x1x128xf32> to vector<1x128xf32>
    %682 = vector.broadcast %10 : f32 to vector<1x128xf32>
    %683 = arith.mulf %583, %682 : vector<1x128xf32>
    %684 = vector.broadcast %11 : f32 to vector<1x128xf32>
    %685 = arith.mulf %602, %684 : vector<1x128xf32>
    %686 = vector.broadcast %12 : f32 to vector<1x128xf32>
    %687 = arith.mulf %621, %686 : vector<1x128xf32>
    %688 = vector.broadcast %13 : f32 to vector<1x128xf32>
    %689 = arith.mulf %640, %688 : vector<1x128xf32>
    %690 = vector.broadcast %14 : f32 to vector<1x128xf32>
    %691 = arith.mulf %659, %690 : vector<1x128xf32>
    %692 = arith.addf %681, %683 : vector<1x128xf32>
    %693 = arith.addf %685, %687 : vector<1x128xf32>
    %694 = arith.addf %689, %691 : vector<1x128xf32>
    %695 = arith.addf %692, %693 : vector<1x128xf32>
    %696 = arith.addf %695, %694 : vector<1x128xf32>
    %697 = math.tanh %696 : vector<1x128xf32>
    %c2_152 = arith.constant 2 : index
    %698 = arith.index_cast %c6_i32 : i32 to index
    %c0_153 = arith.constant 0 : index
    %c0_154 = arith.constant 0 : index
    %699 = vector.load %arg9[%c2_152, %698, %c0_153, %c0_154] : memref<5x8x1x128xf32, #tpu.memory_space<vmem>>, vector<1x1x1x128xf32>
    %700 = vector.shape_cast %699 : vector<1x1x1x128xf32> to vector<1x128xf32>
    %701 = vector.broadcast %15 : f32 to vector<1x128xf32>
    %702 = arith.mulf %583, %701 : vector<1x128xf32>
    %703 = vector.broadcast %16 : f32 to vector<1x128xf32>
    %704 = arith.mulf %602, %703 : vector<1x128xf32>
    %705 = vector.broadcast %17 : f32 to vector<1x128xf32>
    %706 = arith.mulf %621, %705 : vector<1x128xf32>
    %707 = vector.broadcast %18 : f32 to vector<1x128xf32>
    %708 = arith.mulf %640, %707 : vector<1x128xf32>
    %709 = vector.broadcast %19 : f32 to vector<1x128xf32>
    %710 = arith.mulf %659, %709 : vector<1x128xf32>
    %711 = arith.addf %700, %702 : vector<1x128xf32>
    %712 = arith.addf %704, %706 : vector<1x128xf32>
    %713 = arith.addf %708, %710 : vector<1x128xf32>
    %714 = arith.addf %711, %712 : vector<1x128xf32>
    %715 = arith.addf %714, %713 : vector<1x128xf32>
    %716 = math.tanh %715 : vector<1x128xf32>
    %c3_155 = arith.constant 3 : index
    %717 = arith.index_cast %c6_i32 : i32 to index
    %c0_156 = arith.constant 0 : index
    %c0_157 = arith.constant 0 : index
    %718 = vector.load %arg9[%c3_155, %717, %c0_156, %c0_157] : memref<5x8x1x128xf32, #tpu.memory_space<vmem>>, vector<1x1x1x128xf32>
    %719 = vector.shape_cast %718 : vector<1x1x1x128xf32> to vector<1x128xf32>
    %720 = vector.broadcast %20 : f32 to vector<1x128xf32>
    %721 = arith.mulf %583, %720 : vector<1x128xf32>
    %722 = vector.broadcast %21 : f32 to vector<1x128xf32>
    %723 = arith.mulf %602, %722 : vector<1x128xf32>
    %724 = vector.broadcast %22 : f32 to vector<1x128xf32>
    %725 = arith.mulf %621, %724 : vector<1x128xf32>
    %726 = vector.broadcast %23 : f32 to vector<1x128xf32>
    %727 = arith.mulf %640, %726 : vector<1x128xf32>
    %728 = vector.broadcast %24 : f32 to vector<1x128xf32>
    %729 = arith.mulf %659, %728 : vector<1x128xf32>
    %730 = arith.addf %719, %721 : vector<1x128xf32>
    %731 = arith.addf %723, %725 : vector<1x128xf32>
    %732 = arith.addf %727, %729 : vector<1x128xf32>
    %733 = arith.addf %730, %731 : vector<1x128xf32>
    %734 = arith.addf %733, %732 : vector<1x128xf32>
    %735 = math.tanh %734 : vector<1x128xf32>
    %c4_158 = arith.constant 4 : index
    %736 = arith.index_cast %c6_i32 : i32 to index
    %c0_159 = arith.constant 0 : index
    %c0_160 = arith.constant 0 : index
    %737 = vector.load %arg9[%c4_158, %736, %c0_159, %c0_160] : memref<5x8x1x128xf32, #tpu.memory_space<vmem>>, vector<1x1x1x128xf32>
    %738 = vector.shape_cast %737 : vector<1x1x1x128xf32> to vector<1x128xf32>
    %739 = vector.broadcast %25 : f32 to vector<1x128xf32>
    %740 = arith.mulf %583, %739 : vector<1x128xf32>
    %741 = vector.broadcast %26 : f32 to vector<1x128xf32>
    %742 = arith.mulf %602, %741 : vector<1x128xf32>
    %743 = vector.broadcast %27 : f32 to vector<1x128xf32>
    %744 = arith.mulf %621, %743 : vector<1x128xf32>
    %745 = vector.broadcast %28 : f32 to vector<1x128xf32>
    %746 = arith.mulf %640, %745 : vector<1x128xf32>
    %747 = vector.broadcast %29 : f32 to vector<1x128xf32>
    %748 = arith.mulf %659, %747 : vector<1x128xf32>
    %749 = arith.addf %738, %740 : vector<1x128xf32>
    %750 = arith.addf %742, %744 : vector<1x128xf32>
    %751 = arith.addf %746, %748 : vector<1x128xf32>
    %752 = arith.addf %749, %750 : vector<1x128xf32>
    %753 = arith.addf %752, %751 : vector<1x128xf32>
    %754 = math.tanh %753 : vector<1x128xf32>
    %c7_i32 = arith.constant 7 : i32
    %c0_161 = arith.constant 0 : index
    %755 = arith.index_cast %c7_i32 : i32 to index
    %c0_162 = arith.constant 0 : index
    %c0_163 = arith.constant 0 : index
    %756 = vector.load %arg9[%c0_161, %755, %c0_162, %c0_163] : memref<5x8x1x128xf32, #tpu.memory_space<vmem>>, vector<1x1x1x128xf32>
    %757 = vector.shape_cast %756 : vector<1x1x1x128xf32> to vector<1x128xf32>
    %758 = vector.broadcast %5 : f32 to vector<1x128xf32>
    %759 = arith.mulf %678, %758 : vector<1x128xf32>
    %760 = vector.broadcast %6 : f32 to vector<1x128xf32>
    %761 = arith.mulf %697, %760 : vector<1x128xf32>
    %762 = vector.broadcast %7 : f32 to vector<1x128xf32>
    %763 = arith.mulf %716, %762 : vector<1x128xf32>
    %764 = vector.broadcast %8 : f32 to vector<1x128xf32>
    %765 = arith.mulf %735, %764 : vector<1x128xf32>
    %766 = vector.broadcast %9 : f32 to vector<1x128xf32>
    %767 = arith.mulf %754, %766 : vector<1x128xf32>
    %768 = arith.addf %757, %759 : vector<1x128xf32>
    %769 = arith.addf %761, %763 : vector<1x128xf32>
    %770 = arith.addf %765, %767 : vector<1x128xf32>
    %771 = arith.addf %768, %769 : vector<1x128xf32>
    %772 = arith.addf %771, %770 : vector<1x128xf32>
    %773 = math.tanh %772 : vector<1x128xf32>
    %c1_164 = arith.constant 1 : index
    %774 = arith.index_cast %c7_i32 : i32 to index
    %c0_165 = arith.constant 0 : index
    %c0_166 = arith.constant 0 : index
    %775 = vector.load %arg9[%c1_164, %774, %c0_165, %c0_166] : memref<5x8x1x128xf32, #tpu.memory_space<vmem>>, vector<1x1x1x128xf32>
    %776 = vector.shape_cast %775 : vector<1x1x1x128xf32> to vector<1x128xf32>
    %777 = vector.broadcast %10 : f32 to vector<1x128xf32>
    %778 = arith.mulf %678, %777 : vector<1x128xf32>
    %779 = vector.broadcast %11 : f32 to vector<1x128xf32>
    %780 = arith.mulf %697, %779 : vector<1x128xf32>
    %781 = vector.broadcast %12 : f32 to vector<1x128xf32>
    %782 = arith.mulf %716, %781 : vector<1x128xf32>
    %783 = vector.broadcast %13 : f32 to vector<1x128xf32>
    %784 = arith.mulf %735, %783 : vector<1x128xf32>
    %785 = vector.broadcast %14 : f32 to vector<1x128xf32>
    %786 = arith.mulf %754, %785 : vector<1x128xf32>
    %787 = arith.addf %776, %778 : vector<1x128xf32>
    %788 = arith.addf %780, %782 : vector<1x128xf32>
    %789 = arith.addf %784, %786 : vector<1x128xf32>
    %790 = arith.addf %787, %788 : vector<1x128xf32>
    %791 = arith.addf %790, %789 : vector<1x128xf32>
    %792 = math.tanh %791 : vector<1x128xf32>
    %c2_167 = arith.constant 2 : index
    %793 = arith.index_cast %c7_i32 : i32 to index
    %c0_168 = arith.constant 0 : index
    %c0_169 = arith.constant 0 : index
    %794 = vector.load %arg9[%c2_167, %793, %c0_168, %c0_169] : memref<5x8x1x128xf32, #tpu.memory_space<vmem>>, vector<1x1x1x128xf32>
    %795 = vector.shape_cast %794 : vector<1x1x1x128xf32> to vector<1x128xf32>
    %796 = vector.broadcast %15 : f32 to vector<1x128xf32>
    %797 = arith.mulf %678, %796 : vector<1x128xf32>
    %798 = vector.broadcast %16 : f32 to vector<1x128xf32>
    %799 = arith.mulf %697, %798 : vector<1x128xf32>
    %800 = vector.broadcast %17 : f32 to vector<1x128xf32>
    %801 = arith.mulf %716, %800 : vector<1x128xf32>
    %802 = vector.broadcast %18 : f32 to vector<1x128xf32>
    %803 = arith.mulf %735, %802 : vector<1x128xf32>
    %804 = vector.broadcast %19 : f32 to vector<1x128xf32>
    %805 = arith.mulf %754, %804 : vector<1x128xf32>
    %806 = arith.addf %795, %797 : vector<1x128xf32>
    %807 = arith.addf %799, %801 : vector<1x128xf32>
    %808 = arith.addf %803, %805 : vector<1x128xf32>
    %809 = arith.addf %806, %807 : vector<1x128xf32>
    %810 = arith.addf %809, %808 : vector<1x128xf32>
    %811 = math.tanh %810 : vector<1x128xf32>
    %c3_170 = arith.constant 3 : index
    %812 = arith.index_cast %c7_i32 : i32 to index
    %c0_171 = arith.constant 0 : index
    %c0_172 = arith.constant 0 : index
    %813 = vector.load %arg9[%c3_170, %812, %c0_171, %c0_172] : memref<5x8x1x128xf32, #tpu.memory_space<vmem>>, vector<1x1x1x128xf32>
    %814 = vector.shape_cast %813 : vector<1x1x1x128xf32> to vector<1x128xf32>
    %815 = vector.broadcast %20 : f32 to vector<1x128xf32>
    %816 = arith.mulf %678, %815 : vector<1x128xf32>
    %817 = vector.broadcast %21 : f32 to vector<1x128xf32>
    %818 = arith.mulf %697, %817 : vector<1x128xf32>
    %819 = vector.broadcast %22 : f32 to vector<1x128xf32>
    %820 = arith.mulf %716, %819 : vector<1x128xf32>
    %821 = vector.broadcast %23 : f32 to vector<1x128xf32>
    %822 = arith.mulf %735, %821 : vector<1x128xf32>
    %823 = vector.broadcast %24 : f32 to vector<1x128xf32>
    %824 = arith.mulf %754, %823 : vector<1x128xf32>
    %825 = arith.addf %814, %816 : vector<1x128xf32>
    %826 = arith.addf %818, %820 : vector<1x128xf32>
    %827 = arith.addf %822, %824 : vector<1x128xf32>
    %828 = arith.addf %825, %826 : vector<1x128xf32>
    %829 = arith.addf %828, %827 : vector<1x128xf32>
    %830 = math.tanh %829 : vector<1x128xf32>
    %c4_173 = arith.constant 4 : index
    %831 = arith.index_cast %c7_i32 : i32 to index
    %c0_174 = arith.constant 0 : index
    %c0_175 = arith.constant 0 : index
    %832 = vector.load %arg9[%c4_173, %831, %c0_174, %c0_175] : memref<5x8x1x128xf32, #tpu.memory_space<vmem>>, vector<1x1x1x128xf32>
    %833 = vector.shape_cast %832 : vector<1x1x1x128xf32> to vector<1x128xf32>
    %834 = vector.broadcast %25 : f32 to vector<1x128xf32>
    %835 = arith.mulf %678, %834 : vector<1x128xf32>
    %836 = vector.broadcast %26 : f32 to vector<1x128xf32>
    %837 = arith.mulf %697, %836 : vector<1x128xf32>
    %838 = vector.broadcast %27 : f32 to vector<1x128xf32>
    %839 = arith.mulf %716, %838 : vector<1x128xf32>
    %840 = vector.broadcast %28 : f32 to vector<1x128xf32>
    %841 = arith.mulf %735, %840 : vector<1x128xf32>
    %842 = vector.broadcast %29 : f32 to vector<1x128xf32>
    %843 = arith.mulf %754, %842 : vector<1x128xf32>
    %844 = arith.addf %833, %835 : vector<1x128xf32>
    %845 = arith.addf %837, %839 : vector<1x128xf32>
    %846 = arith.addf %841, %843 : vector<1x128xf32>
    %847 = arith.addf %844, %845 : vector<1x128xf32>
    %848 = arith.addf %847, %846 : vector<1x128xf32>
    %849 = math.tanh %848 : vector<1x128xf32>
    %c8_i32 = arith.constant 8 : i32
    %c0_176 = arith.constant 0 : index
    %c0_177 = arith.constant 0 : index
    %c0_178 = arith.constant 0 : index
    %850 = vector.load %arg10[%c0_176, %c0_177, %c0_178] : memref<5x1x128xf32, #tpu.memory_space<vmem>>, vector<1x1x128xf32>
    %851 = vector.shape_cast %850 : vector<1x1x128xf32> to vector<1x128xf32>
    %852 = vector.shape_cast %773 : vector<1x128xf32> to vector<1x1x128xf32>
    tpu.vector_store %arg10[%c0_176, %c0_177, %c0_178], %852 {strides = array<i32>} : memref<5x1x128xf32, #tpu.memory_space<vmem>>, vector<1x1x128xf32>,
    %c1_179 = arith.constant 1 : index
    %c0_180 = arith.constant 0 : index
    %c0_181 = arith.constant 0 : index
    %853 = vector.load %arg10[%c1_179, %c0_180, %c0_181] : memref<5x1x128xf32, #tpu.memory_space<vmem>>, vector<1x1x128xf32>
    %854 = vector.shape_cast %853 : vector<1x1x128xf32> to vector<1x128xf32>
    %855 = vector.shape_cast %792 : vector<1x128xf32> to vector<1x1x128xf32>
    tpu.vector_store %arg10[%c1_179, %c0_180, %c0_181], %855 {strides = array<i32>} : memref<5x1x128xf32, #tpu.memory_space<vmem>>, vector<1x1x128xf32>,
    %c2_182 = arith.constant 2 : index
    %c0_183 = arith.constant 0 : index
    %c0_184 = arith.constant 0 : index
    %856 = vector.load %arg10[%c2_182, %c0_183, %c0_184] : memref<5x1x128xf32, #tpu.memory_space<vmem>>, vector<1x1x128xf32>
    %857 = vector.shape_cast %856 : vector<1x1x128xf32> to vector<1x128xf32>
    %858 = vector.shape_cast %811 : vector<1x128xf32> to vector<1x1x128xf32>
    tpu.vector_store %arg10[%c2_182, %c0_183, %c0_184], %858 {strides = array<i32>} : memref<5x1x128xf32, #tpu.memory_space<vmem>>, vector<1x1x128xf32>,
    %c3_185 = arith.constant 3 : index
    %c0_186 = arith.constant 0 : index
    %c0_187 = arith.constant 0 : index
    %859 = vector.load %arg10[%c3_185, %c0_186, %c0_187] : memref<5x1x128xf32, #tpu.memory_space<vmem>>, vector<1x1x128xf32>
    %860 = vector.shape_cast %859 : vector<1x1x128xf32> to vector<1x128xf32>
    %861 = vector.shape_cast %830 : vector<1x128xf32> to vector<1x1x128xf32>
    tpu.vector_store %arg10[%c3_185, %c0_186, %c0_187], %861 {strides = array<i32>} : memref<5x1x128xf32, #tpu.memory_space<vmem>>, vector<1x1x128xf32>,
    %c4_188 = arith.constant 4 : index
    %c0_189 = arith.constant 0 : index
    %c0_190 = arith.constant 0 : index
    %862 = vector.load %arg10[%c4_188, %c0_189, %c0_190] : memref<5x1x128xf32, #tpu.memory_space<vmem>>, vector<1x1x128xf32>
    %863 = vector.shape_cast %862 : vector<1x1x128xf32> to vector<1x128xf32>
    %864 = vector.shape_cast %849 : vector<1x128xf32> to vector<1x1x128xf32>
    tpu.vector_store %arg10[%c4_188, %c0_189, %c0_190], %864 {strides = array<i32>} : memref<5x1x128xf32, #tpu.memory_space<vmem>>, vector<1x1x128xf32>,
    %c0_i32_191 = arith.constant 0 : i32
    %865 = arith.cmpi eq, %arg1, %c0_i32_191 : i32
    %866 = arith.extui %865 : i1 to i32
    %c0_i32_192 = arith.constant 0 : i32
    %867 = arith.cmpi ne, %866, %c0_i32_192 : i32
    scf.if %867 {
      %cst = arith.constant 0.000000e+00 : f32
      %868 = vector.broadcast %cst : f32 to vector<1x128xf32>
      %869 = arith.maximumf %773, %868 : vector<1x128xf32>
      %870 = vector.broadcast %35 : f32 to vector<1x128xf32>
      %871 = arith.mulf %869, %870 : vector<1x128xf32>
      %872 = vector.broadcast %40 : f32 to vector<1x128xf32>
      %873 = arith.addf %871, %872 : vector<1x128xf32>
      %cst_193 = arith.constant 0.000000e+00 : f32
      %874 = vector.broadcast %cst_193 : f32 to vector<1x128xf32>
      %875 = arith.maximumf %792, %874 : vector<1x128xf32>
      %876 = vector.broadcast %36 : f32 to vector<1x128xf32>
      %877 = arith.mulf %875, %876 : vector<1x128xf32>
      %878 = arith.addf %873, %877 : vector<1x128xf32>
      %cst_194 = arith.constant 0.000000e+00 : f32
      %879 = vector.broadcast %cst_194 : f32 to vector<1x128xf32>
      %880 = arith.maximumf %811, %879 : vector<1x128xf32>
      %881 = vector.broadcast %37 : f32 to vector<1x128xf32>
      %882 = arith.mulf %880, %881 : vector<1x128xf32>
      %883 = arith.addf %878, %882 : vector<1x128xf32>
      %cst_195 = arith.constant 0.000000e+00 : f32
      %884 = vector.broadcast %cst_195 : f32 to vector<1x128xf32>
      %885 = arith.maximumf %830, %884 : vector<1x128xf32>
      %886 = vector.broadcast %38 : f32 to vector<1x128xf32>
      %887 = arith.mulf %885, %886 : vector<1x128xf32>
      %888 = arith.addf %883, %887 : vector<1x128xf32>
      %cst_196 = arith.constant 0.000000e+00 : f32
      %889 = vector.broadcast %cst_196 : f32 to vector<1x128xf32>
      %890 = arith.maximumf %849, %889 : vector<1x128xf32>
      %891 = vector.broadcast %39 : f32 to vector<1x128xf32>
      %892 = arith.mulf %890, %891 : vector<1x128xf32>
      %893 = arith.addf %888, %892 : vector<1x128xf32>
      %c0_197 = arith.constant 0 : index
      %c0_198 = arith.constant 0 : index
      %894 = vector.load %arg8[%c0_197, %c0_198] : memref<1x128xf32, #tpu.memory_space<vmem>>, vector<1x128xf32>
      tpu.vector_store %arg8[%c0_197, %c0_198], %893 {strides = array<i32>} : memref<1x128xf32, #tpu.memory_space<vmem>>, vector<1x128xf32>,
    } else {
    }
    return
  }
  func.func @transform_0(%arg0: i32, %arg1: i32) -> i32 {
    %c0_i32 = arith.constant 0 : i32
    %c0_i32_0 = arith.constant 0 : i32
    return %c0_i32 : i32
  }
  func.func @transform_1(%arg0: i32, %arg1: i32) -> i32 {
    %c0_i32 = arith.constant 0 : i32
    %c0_i32_0 = arith.constant 0 : i32
    return %c0_i32 : i32
  }
  func.func @transform_2(%arg0: i32, %arg1: i32) -> i32 {
    %c0_i32 = arith.constant 0 : i32
    %c0_i32_0 = arith.constant 0 : i32
    return %c0_i32 : i32
  }
  func.func @transform_3(%arg0: i32, %arg1: i32) -> i32 {
    %c0_i32 = arith.constant 0 : i32
    %c0_i32_0 = arith.constant 0 : i32
    return %c0_i32 : i32
  }
  func.func @transform_4(%arg0: i32, %arg1: i32) -> i32 {
    %c0_i32 = arith.constant 0 : i32
    %c0_i32_0 = arith.constant 0 : i32
    return %c0_i32 : i32
  }
  func.func @transform_5(%arg0: i32, %arg1: i32) -> (i32, i32, i32) {
    %c0_i32 = arith.constant 0 : i32
    %c0_i32_0 = arith.constant 0 : i32
    return %arg1, %arg0, %c0_i32 : i32, i32, i32
  }
  func.func @transform_6(%arg0: i32, %arg1: i32) -> (i32, i32) {
    %c0_i32 = arith.constant 0 : i32
    %c0_i32_0 = arith.constant 0 : i32
    return %arg0, %c0_i32 : i32, i32
  }
}

</mosaic_0001>

<llo_original>
// kernel: tpu_custom_call.1
$region0: #{tpu_custom_call.1}
  #allocation0 [shape = 'u32[]', space=smem, size = 0x4, offset = 0x4, fixed_abs, tag = 'smem constant byte address 0x4 - core index']
  #allocation1 [shape = 'u32[144,128]{1,0:T(1,128)}', space=vmem, size = 0x12000, scoped, tag = 'internal scratch']
  #allocation2 [shape = 'f32[5,8,1,128]{3,2,1,0:T(1,128)}', space=vmem, size = 0x5000, scoped, tag = 'scratch operand']
  #allocation3 [shape = 'f32[5,1,128]{2,1,0:T(1,128)}', space=vmem, size = 0xa00, scoped, tag = 'scratch operand']
  #allocation4 [shape = 'f32[1]{0:T(128)S(6)}', space=smem, size = 0x200, scoped, tag = 'scoped memory for tpu_custom_call.1']
  %s0 = inlined_call_operand.vmem [shape: f32[5], index: 0, kind: input, shape index: {}]
  %s1 = inlined_call_operand.hbm [shape: f32[25], index: 1, kind: input, shape index: {}]
  %s2 = inlined_call_operand.hbm [shape: f32[5], index: 2, kind: input, shape index: {}]
  %s3 = inlined_call_operand.hbm [shape: f32[5], index: 3, kind: input, shape index: {}]
  %s4 = inlined_call_operand.<no memory space> [shape: f32[1], index: 4, kind: input, shape index: {}]
  %s5 = inlined_call_operand.vmem [shape: f32[8,1,128], index: 5, kind: input, shape index: {}]
  %s6 = inlined_call_operand.hbm [shape: f32[1,128], index: 6, kind: output, shape index: {}]
  %s7 = sld [smem:[#allocation0]]
  $region58: #{tpu_custom_call.1} parent=0
    _
  %s9 = ssub.s32 1, %s7
  %s10 = scalar_select 0, %s9, %s7
  %11 = sst [smem:[#allocation4]] %s4
  $region1: #{tpu_custom_call.1} parent=0
    #allocation5 [shape = 'u8[512]{0}', space=smem, size = 0x200, scoped, tag = 'input window, operand 0, single buffered']
    #allocation6 [shape = 's32[1]{0}', space=sflag, size = 0x4, scoped, tag = 'scoped memory for tpu_custom_call.1']
    #allocation7 [shape = 's32[1]{0}', space=sflag, size = 0x4, scoped, tag = 'scoped memory for tpu_custom_call.1']
    #allocation8 [shape = 's32[1]{0}', space=sflag, size = 0x4, scoped, tag = 'scoped memory for tpu_custom_call.1']
    #allocation9 [shape = 'u8[512]{0}', space=smem, size = 0x200, scoped, tag = 'input window, operand 1, single buffered']
    #allocation10 [shape = 'u8[512]{0}', space=smem, size = 0x200, scoped, tag = 'input window, operand 2, single buffered']
    #allocation11 [shape = 's32[1]{0}', space=sflag, size = 0x4, scoped, tag = 'scoped memory for tpu_custom_call.1']
    #allocation12 [shape = 'u8[512]{0}', space=smem, size = 0x200, scoped, tag = 'input window, operand 3, single buffered']
    #allocation13 [shape = 'u8[512]{0}', space=vmem, size = 0x400, scoped, tag = 'output window, operand 0, single buffered']
    %12 = vsyncpa [#allocation8], 0
    %13 = vsyncpa [#allocation7], 0
    %14 = vsyncpa [#allocation11], 0
    %15 = vsyncpa [#allocation6], 0
    // Predicated region
    $region2: #{tpu_custom_call.1} parent=1 // pred_check
      _
    $region3: #{tpu_custom_call.1} parent=1 // pred_check_branch
      %17 = sbr.rel (0) target = $region5
    $region4: #{tpu_custom_call.1} parent=1 // pred_region
      %s19 = ssub.s32 16, 16
      %20 = vsyncadd [#allocation8], %s19
      %s22 = sshll.u32 %s0, 4
      %s23 = int_to_ptr.vmem [resolvable:$true] %s22
      %25 = dma.vmem_to_smem %s23, 16, [#allocation5], [#allocation8]
    $region5: #{tpu_custom_call.1} parent=1 // pred_fallthru
      _
    // Predicated region
    $region6: #{tpu_custom_call.1} parent=1 // pred_check
      _
    $region7: #{tpu_custom_call.1} parent=1 // pred_check_branch
      %27 = sbr.rel (0) target = $region9
    $region8: #{tpu_custom_call.1} parent=1 // pred_region
      %s29 = ssub.s32 16, 16
      %30 = vsyncadd [#allocation7], %s29
      %33 = dma.hbm_to_smem %s1, 16, [#allocation9], [#allocation7]
    $region9: #{tpu_custom_call.1} parent=1 // pred_fallthru
      _
    // Predicated region
    $region10: #{tpu_custom_call.1} parent=1 // pred_check
      _
    $region11: #{tpu_custom_call.1} parent=1 // pred_check_branch
      %35 = sbr.rel (0) target = $region13
    $region12: #{tpu_custom_call.1} parent=1 // pred_region
      %s37 = ssub.s32 16, 16
      %38 = vsyncadd [#allocation11], %s37
      %41 = dma.hbm_to_smem %s2, 16, [#allocation10], [#allocation11]
    $region13: #{tpu_custom_call.1} parent=1 // pred_fallthru
      _
    // Predicated region
    $region14: #{tpu_custom_call.1} parent=1 // pred_check
      _
    $region15: #{tpu_custom_call.1} parent=1 // pred_check_branch
      %43 = sbr.rel (0) target = $region17
    $region16: #{tpu_custom_call.1} parent=1 // pred_region
      %s45 = ssub.s32 16, 16
      %46 = vsyncadd [#allocation11], %s45
      %49 = dma.hbm_to_smem %s3, 16, [#allocation12], [#allocation11]
    $region17: #{tpu_custom_call.1} parent=1 // pred_fallthru
      _
    // Predicated region
    $region18: #{tpu_custom_call.1} parent=1 // pred_check
      _
    $region19: #{tpu_custom_call.1} parent=1 // pred_check_branch
      %51 = sbr.rel (0) target = $region21
    $region20: #{tpu_custom_call.1} parent=1 // pred_region
      _
    $region21: #{tpu_custom_call.1} parent=1 // pred_fallthru
      _
    // Predicated region
    $region22: #{tpu_custom_call.1} parent=1 // pred_check
      _
    $region23: #{tpu_custom_call.1} parent=1 // pred_check_branch
      %53 = sbr.rel (0) target = $region25
    $region24: #{tpu_custom_call.1} parent=1 // pred_region
      _
    $region25: #{tpu_custom_call.1} parent=1 // pred_fallthru
      _
    // Predicated region
    $region26: #{tpu_custom_call.1} parent=1 // pred_check
      _
    $region27: #{tpu_custom_call.1} parent=1 // pred_check_branch
      %55 = sbr.rel (0) target = $region29
    $region28: #{tpu_custom_call.1} parent=1 // pred_region
      %56 = dma.done [#allocation8], 16
    $region29: #{tpu_custom_call.1} parent=1 // pred_fallthru
      _
    // Predicated region
    $region30: #{tpu_custom_call.1} parent=1 // pred_check
      _
    $region31: #{tpu_custom_call.1} parent=1 // pred_check_branch
      %58 = sbr.rel (0) target = $region33
    $region32: #{tpu_custom_call.1} parent=1 // pred_region
      %59 = dma.done [#allocation7], 16
    $region33: #{tpu_custom_call.1} parent=1 // pred_fallthru
      _
    // Predicated region
    $region34: #{tpu_custom_call.1} parent=1 // pred_check
      _
    $region35: #{tpu_custom_call.1} parent=1 // pred_check_branch
      %61 = sbr.rel (0) target = $region37
    $region36: #{tpu_custom_call.1} parent=1 // pred_region
      %62 = dma.done [#allocation11], 16
    $region37: #{tpu_custom_call.1} parent=1 // pred_fallthru
      _
    // Predicated region
    $region38: #{tpu_custom_call.1} parent=1 // pred_check
      _
    $region39: #{tpu_custom_call.1} parent=1 // pred_check_branch
      %64 = sbr.rel (0) target = $region41
    $region40: #{tpu_custom_call.1} parent=1 // pred_region
      %65 = dma.done [#allocation11], 16
    $region41: #{tpu_custom_call.1} parent=1 // pred_fallthru
      _
    %66 = sfence
    %s67 = sld [smem:[#allocation5]]
    %s68 = sld [smem:[#allocation5 + $0x1]]
    %s69 = sld [smem:[#allocation5 + $0x2]]
    %s70 = sld [smem:[#allocation5 + $0x3]]
    %s71 = sld [smem:[#allocation5 + $0x4]]
    %s72 = sld [smem:[#allocation9]]
    %s73 = sld [smem:[#allocation9 + $0x1]]
    %s74 = sld [smem:[#allocation9 + $0x2]]
    %s75 = sld [smem:[#allocation9 + $0x3]]
    %s76 = sld [smem:[#allocation9 + $0x4]]
    %s77 = sld [smem:[#allocation9 + $0x5]]
    %s78 = sld [smem:[#allocation9 + $0x6]]
    %s79 = sld [smem:[#allocation9 + $0x7]]
    %s80 = sld [smem:[#allocation9 + $0x8]]
    %s81 = sld [smem:[#allocation9 + $0x9]]
    %s82 = sld [smem:[#allocation9 + $0xa]]
    %s83 = sld [smem:[#allocation9 + $0xb]]
    %s84 = sld [smem:[#allocation9 + $0xc]]
    %s85 = sld [smem:[#allocation9 + $0xd]]
    %s86 = sld [smem:[#allocation9 + $0xe]]
    %s87 = sld [smem:[#allocation9 + $0xf]]
    %s88 = sld [smem:[#allocation9 + $0x10]]
    %s89 = sld [smem:[#allocation9 + $0x11]]
    %s90 = sld [smem:[#allocation9 + $0x12]]
    %s91 = sld [smem:[#allocation9 + $0x13]]
    %s92 = sld [smem:[#allocation9 + $0x14]]
    %s93 = sld [smem:[#allocation9 + $0x15]]
    %s94 = sld [smem:[#allocation9 + $0x16]]
    %s95 = sld [smem:[#allocation9 + $0x17]]
    %s96 = sld [smem:[#allocation9 + $0x18]]
    %s97 = sld [smem:[#allocation10]]
    %s98 = sld [smem:[#allocation10 + $0x1]]
    %s99 = sld [smem:[#allocation10 + $0x2]]
    %s100 = sld [smem:[#allocation10 + $0x3]]
    %s101 = sld [smem:[#allocation10 + $0x4]]
    %s102 = sld [smem:[#allocation12]]
    %s103 = sld [smem:[#allocation12 + $0x1]]
    %s104 = sld [smem:[#allocation12 + $0x2]]
    %s105 = sld [smem:[#allocation12 + $0x3]]
    %s106 = sld [smem:[#allocation12 + $0x4]]
    %s107 = sld [smem:[#allocation4]]
    %p108 = scmp.eq.s32.totalorder 0, 0
    // Predicated region
    $region42: #{tpu_custom_call.1} parent=1 // pred_check
      %p109 = pneg %p108
    $region43: #{tpu_custom_call.1} parent=1 // pred_check_branch
      %111 = sbr.rel (%p109) target = $region45
    $region44: #{tpu_custom_call.1} parent=1 // pred_region
      %112 = vst [vmem:[#allocation3] sm:$0x1] 0.0
      %113 = vst [vmem:[#allocation3 + $0x1] sm:$0x1] 0.0
      %114 = vst [vmem:[#allocation3 + $0x2] sm:$0x1] 0.0
      %115 = vst [vmem:[#allocation3 + $0x3] sm:$0x1] 0.0
      %116 = vst [vmem:[#allocation3 + $0x4] sm:$0x1] 0.0
    $region45: #{tpu_custom_call.1} parent=1 // pred_fallthru
      _
    %v117 = vld [vmem:[%s5] sm:$0x1]
    %v118 = vld [vmem:[%s5 + $0x1] sm:$0x1]
    %v119 = vld [vmem:[%s5 + $0x2] sm:$0x1]
    %v120 = vld [vmem:[%s5 + $0x3] sm:$0x1]
    %v121 = vld [vmem:[%s5 + $0x4] sm:$0x1]
    %v122 = vld [vmem:[%s5 + $0x5] sm:$0x1]
    %v123 = vld [vmem:[%s5 + $0x6] sm:$0x1]
    %v124 = vld [vmem:[%s5 + $0x7] sm:$0x1]
    %v125 = vstv %s67
    %v126 = vmul.f32 %v117, %v125
    %v127 = vmul.f32 %v118, %v125
    %v128 = vmul.f32 %v119, %v125
    %v129 = vmul.f32 %v120, %v125
    %v130 = vmul.f32 %v121, %v125
    %v131 = vmul.f32 %v122, %v125
    %v132 = vmul.f32 %v123, %v125
    %v133 = vmul.f32 %v124, %v125
    %v134 = vstv %s97
    %v135 = vadd.f32 %v126, %v134
    %v136 = vadd.f32 %v127, %v134
    %v137 = vadd.f32 %v128, %v134
    %v138 = vadd.f32 %v129, %v134
    %v139 = vadd.f32 %v130, %v134
    %v140 = vadd.f32 %v131, %v134
    %v141 = vadd.f32 %v132, %v134
    %v142 = vadd.f32 %v133, %v134
    %143 = vst [vmem:[#allocation2] sm:$0x1] %v135
    %144 = vst [vmem:[#allocation2 + $0x1] sm:$0x1] %v136
    %145 = vst [vmem:[#allocation2 + $0x2] sm:$0x1] %v137
    %146 = vst [vmem:[#allocation2 + $0x3] sm:$0x1] %v138
    %147 = vst [vmem:[#allocation2 + $0x4] sm:$0x1] %v139
    %148 = vst [vmem:[#allocation2 + $0x5] sm:$0x1] %v140
    %149 = vst [vmem:[#allocation2 + $0x6] sm:$0x1] %v141
    %150 = vst [vmem:[#allocation2 + $0x7] sm:$0x1] %v142
    %v151 = vstv %s68
    %v152 = vmul.f32 %v117, %v151
    %v153 = vmul.f32 %v118, %v151
    %v154 = vmul.f32 %v119, %v151
    %v155 = vmul.f32 %v120, %v151
    %v156 = vmul.f32 %v121, %v151
    %v157 = vmul.f32 %v122, %v151
    %v158 = vmul.f32 %v123, %v151
    %v159 = vmul.f32 %v124, %v151
    %v160 = vstv %s98
    %v161 = vadd.f32 %v152, %v160
    %v162 = vadd.f32 %v153, %v160
    %v163 = vadd.f32 %v154, %v160
    %v164 = vadd.f32 %v155, %v160
    %v165 = vadd.f32 %v156, %v160
    %v166 = vadd.f32 %v157, %v160
    %v167 = vadd.f32 %v158, %v160
    %v168 = vadd.f32 %v159, %v160
    %s169 = scalar_lea.vmem [#allocation2], 8
    %170 = vst [vmem:[%s169] sm:$0x1] %v161
    %171 = vst [vmem:[%s169 + $0x1] sm:$0x1] %v162
    %172 = vst [vmem:[%s169 + $0x2] sm:$0x1] %v163
    %173 = vst [vmem:[%s169 + $0x3] sm:$0x1] %v164
    %174 = vst [vmem:[%s169 + $0x4] sm:$0x1] %v165
    %175 = vst [vmem:[%s169 + $0x5] sm:$0x1] %v166
    %176 = vst [vmem:[%s169 + $0x6] sm:$0x1] %v167
    %177 = vst [vmem:[%s169 + $0x7] sm:$0x1] %v168
    %v178 = vstv %s69
    %v179 = vmul.f32 %v117, %v178
    %v180 = vmul.f32 %v118, %v178
    %v181 = vmul.f32 %v119, %v178
    %v182 = vmul.f32 %v120, %v178
    %v183 = vmul.f32 %v121, %v178
    %v184 = vmul.f32 %v122, %v178
    %v185 = vmul.f32 %v123, %v178
    %v186 = vmul.f32 %v124, %v178
    %v187 = vstv %s99
    %v188 = vadd.f32 %v179, %v187
    %v189 = vadd.f32 %v180, %v187
    %v190 = vadd.f32 %v181, %v187
    %v191 = vadd.f32 %v182, %v187
    %v192 = vadd.f32 %v183, %v187
    %v193 = vadd.f32 %v184, %v187
    %v194 = vadd.f32 %v185, %v187
    %v195 = vadd.f32 %v186, %v187
    %s196 = scalar_lea.vmem [#allocation2], 16
    %197 = vst [vmem:[%s196] sm:$0x1] %v188
    %198 = vst [vmem:[%s196 + $0x1] sm:$0x1] %v189
    %199 = vst [vmem:[%s196 + $0x2] sm:$0x1] %v190
    %200 = vst [vmem:[%s196 + $0x3] sm:$0x1] %v191
    %201 = vst [vmem:[%s196 + $0x4] sm:$0x1] %v192
    %202 = vst [vmem:[%s196 + $0x5] sm:$0x1] %v193
    %203 = vst [vmem:[%s196 + $0x6] sm:$0x1] %v194
    %204 = vst [vmem:[%s196 + $0x7] sm:$0x1] %v195
    %v205 = vstv %s70
    %v206 = vmul.f32 %v117, %v205
    %v207 = vmul.f32 %v118, %v205
    %v208 = vmul.f32 %v119, %v205
    %v209 = vmul.f32 %v120, %v205
    %v210 = vmul.f32 %v121, %v205
    %v211 = vmul.f32 %v122, %v205
    %v212 = vmul.f32 %v123, %v205
    %v213 = vmul.f32 %v124, %v205
    %v214 = vstv %s100
    %v215 = vadd.f32 %v206, %v214
    %v216 = vadd.f32 %v207, %v214
    %v217 = vadd.f32 %v208, %v214
    %v218 = vadd.f32 %v209, %v214
    %v219 = vadd.f32 %v210, %v214
    %v220 = vadd.f32 %v211, %v214
    %v221 = vadd.f32 %v212, %v214
    %v222 = vadd.f32 %v213, %v214
    %s223 = scalar_lea.vmem [#allocation2], 24
    %224 = vst [vmem:[%s223] sm:$0x1] %v215
    %225 = vst [vmem:[%s223 + $0x1] sm:$0x1] %v216
    %226 = vst [vmem:[%s223 + $0x2] sm:$0x1] %v217
    %227 = vst [vmem:[%s223 + $0x3] sm:$0x1] %v218
    %228 = vst [vmem:[%s223 + $0x4] sm:$0x1] %v219
    %229 = vst [vmem:[%s223 + $0x5] sm:$0x1] %v220
    %230 = vst [vmem:[%s223 + $0x6] sm:$0x1] %v221
    %231 = vst [vmem:[%s223 + $0x7] sm:$0x1] %v222
    %v232 = vstv %s71
    %v233 = vmul.f32 %v117, %v232
    %v234 = vmul.f32 %v118, %v232
    %v235 = vmul.f32 %v119, %v232
    %v236 = vmul.f32 %v120, %v232
    %v237 = vmul.f32 %v121, %v232
    %v238 = vmul.f32 %v122, %v232
    %v239 = vmul.f32 %v123, %v232
    %v240 = vmul.f32 %v124, %v232
    %v241 = vstv %s101
    %v242 = vadd.f32 %v233, %v241
    %v243 = vadd.f32 %v234, %v241
    %v244 = vadd.f32 %v235, %v241
    %v245 = vadd.f32 %v236, %v241
    %v246 = vadd.f32 %v237, %v241
    %v247 = vadd.f32 %v238, %v241
    %v248 = vadd.f32 %v239, %v241
    %v249 = vadd.f32 %v240, %v241
    %s250 = scalar_lea.vmem [#allocation2], 32
    %251 = vst [vmem:[%s250] sm:$0x1] %v242
    %252 = vst [vmem:[%s250 + $0x1] sm:$0x1] %v243
    %253 = vst [vmem:[%s250 + $0x2] sm:$0x1] %v244
    %254 = vst [vmem:[%s250 + $0x3] sm:$0x1] %v245
    %255 = vst [vmem:[%s250 + $0x4] sm:$0x1] %v246
    %256 = vst [vmem:[%s250 + $0x5] sm:$0x1] %v247
    %257 = vst [vmem:[%s250 + $0x6] sm:$0x1] %v248
    %258 = vst [vmem:[%s250 + $0x7] sm:$0x1] %v249
    %v259 = vld [vmem:[#allocation3] sm:$0x1]
    %s260 = scalar_lea.vmem [#allocation3], 1
    %v261 = vld [vmem:[%s260] sm:$0x1]
    %s262 = scalar_lea.vmem [#allocation3], 2
    %v263 = vld [vmem:[%s262] sm:$0x1]
    %s264 = scalar_lea.vmem [#allocation3], 3
    %v265 = vld [vmem:[%s264] sm:$0x1]
    %s266 = scalar_lea.vmem [#allocation3], 4
    %v267 = vld [vmem:[%s266] sm:$0x1]
    %v268 = vld [vmem:[#allocation2] sm:$0x1]
    %v269 = vstv %s72
    %v270 = vmul.f32 %v259, %v269
    %v271 = vstv %s73
    %v272 = vmul.f32 %v261, %v271
    %v273 = vstv %s74
    %v274 = vmul.f32 %v263, %v273
    %v275 = vstv %s75
    %v276 = vmul.f32 %v265, %v275
    %v277 = vstv %s76
    %v278 = vmul.f32 %v267, %v277
    %v279 = vadd.f32 %v268, %v270
    %v280 = vadd.f32 %v272, %v274
    %v281 = vadd.f32 %v276, %v278
    %v282 = vadd.f32 %v279, %v280
    %v283 = vadd.f32 %v282, %v281
    %v284 = vtanh.pop %v283
    %v285 = vld [vmem:[%s169] sm:$0x1]
    %v286 = vstv %s77
    %v287 = vmul.f32 %v259, %v286
    %v288 = vstv %s78
    %v289 = vmul.f32 %v261, %v288
    %v290 = vstv %s79
    %v291 = vmul.f32 %v263, %v290
    %v292 = vstv %s80
    %v293 = vmul.f32 %v265, %v292
    %v294 = vstv %s81
    %v295 = vmul.f32 %v267, %v294
    %v296 = vadd.f32 %v285, %v287
    %v297 = vadd.f32 %v289, %v291
    %v298 = vadd.f32 %v293, %v295
    %v299 = vadd.f32 %v296, %v297
    %v300 = vadd.f32 %v299, %v298
    %v301 = vtanh.pop %v300
    %v302 = vld [vmem:[%s196] sm:$0x1]
    %v303 = vstv %s82
    %v304 = vmul.f32 %v259, %v303
    %v305 = vstv %s83
    %v306 = vmul.f32 %v261, %v305
    %v307 = vstv %s84
    %v308 = vmul.f32 %v263, %v307
    %v309 = vstv %s85
    %v310 = vmul.f32 %v265, %v309
    %v311 = vstv %s86
    %v312 = vmul.f32 %v267, %v311
    %v313 = vadd.f32 %v302, %v304
    %v314 = vadd.f32 %v306, %v308
    %v315 = vadd.f32 %v310, %v312
    %v316 = vadd.f32 %v313, %v314
    %v317 = vadd.f32 %v316, %v315
    %v318 = vtanh.pop %v317
    %v319 = vld [vmem:[%s223] sm:$0x1]
    %v320 = vstv %s87
    %v321 = vmul.f32 %v259, %v320
    %v322 = vstv %s88
    %v323 = vmul.f32 %v261, %v322
    %v324 = vstv %s89
    %v325 = vmul.f32 %v263, %v324
    %v326 = vstv %s90
    %v327 = vmul.f32 %v265, %v326
    %v328 = vstv %s91
    %v329 = vmul.f32 %v267, %v328
    %v330 = vadd.f32 %v319, %v321
    %v331 = vadd.f32 %v323, %v325
    %v332 = vadd.f32 %v327, %v329
    %v333 = vadd.f32 %v330, %v331
    %v334 = vadd.f32 %v333, %v332
    %v335 = vtanh.pop %v334
    %v336 = vld [vmem:[%s250] sm:$0x1]
    %v337 = vstv %s92
    %v338 = vmul.f32 %v259, %v337
    %v339 = vstv %s93
    %v340 = vmul.f32 %v261, %v339
    %v341 = vstv %s94
    %v342 = vmul.f32 %v263, %v341
    %v343 = vstv %s95
    %v344 = vmul.f32 %v265, %v343
    %v345 = vstv %s96
    %v346 = vmul.f32 %v267, %v345
    %v347 = vadd.f32 %v336, %v338
    %v348 = vadd.f32 %v340, %v342
    %v349 = vadd.f32 %v344, %v346
    %v350 = vadd.f32 %v347, %v348
    %v351 = vadd.f32 %v350, %v349
    %v352 = vtanh.pop %v351
    %s353 = scalar_lea.vmem [#allocation2], 1
    %v354 = vld [vmem:[%s353] sm:$0x1]
    %v355 = vmul.f32 %v284, %v269
    %v356 = vmul.f32 %v301, %v271
    %v357 = vmul.f32 %v318, %v273
    %v358 = vmul.f32 %v335, %v275
    %v359 = vmul.f32 %v352, %v277
    %v360 = vadd.f32 %v354, %v355
    %v361 = vadd.f32 %v356, %v357
    %v362 = vadd.f32 %v358, %v359
    %v363 = vadd.f32 %v360, %v361
    %v364 = vadd.f32 %v363, %v362
    %v365 = vtanh.pop %v364
    %s366 = scalar_lea.vmem [#allocation2], 9
    %v367 = vld [vmem:[%s366] sm:$0x1]
    %v368 = vmul.f32 %v284, %v286
    %v369 = vmul.f32 %v301, %v288
    %v370 = vmul.f32 %v318, %v290
    %v371 = vmul.f32 %v335, %v292
    %v372 = vmul.f32 %v352, %v294
    %v373 = vadd.f32 %v367, %v368
    %v374 = vadd.f32 %v369, %v370
    %v375 = vadd.f32 %v371, %v372
    %v376 = vadd.f32 %v373, %v374
    %v377 = vadd.f32 %v376, %v375
    %v378 = vtanh.pop %v377
    %s379 = scalar_lea.vmem [#allocation2], 17
    %v380 = vld [vmem:[%s379] sm:$0x1]
    %v381 = vmul.f32 %v284, %v303
    %v382 = vmul.f32 %v301, %v305
    %v383 = vmul.f32 %v318, %v307
    %v384 = vmul.f32 %v335, %v309
    %v385 = vmul.f32 %v352, %v311
    %v386 = vadd.f32 %v380, %v381
    %v387 = vadd.f32 %v382, %v383
    %v388 = vadd.f32 %v384, %v385
    %v389 = vadd.f32 %v386, %v387
    %v390 = vadd.f32 %v389, %v388
    %v391 = vtanh.pop %v390
    %s392 = scalar_lea.vmem [#allocation2], 25
    %v393 = vld [vmem:[%s392] sm:$0x1]
    %v394 = vmul.f32 %v284, %v320
    %v395 = vmul.f32 %v301, %v322
    %v396 = vmul.f32 %v318, %v324
    %v397 = vmul.f32 %v335, %v326
    %v398 = vmul.f32 %v352, %v328
    %v399 = vadd.f32 %v393, %v394
    %v400 = vadd.f32 %v395, %v396
    %v401 = vadd.f32 %v397, %v398
    %v402 = vadd.f32 %v399, %v400
    %v403 = vadd.f32 %v402, %v401
    %v404 = vtanh.pop %v403
    %s405 = scalar_lea.vmem [#allocation2], 33
    %v406 = vld [vmem:[%s405] sm:$0x1]
    %v407 = vmul.f32 %v284, %v337
    %v408 = vmul.f32 %v301, %v339
    %v409 = vmul.f32 %v318, %v341
    %v410 = vmul.f32 %v335, %v343
    %v411 = vmul.f32 %v352, %v345
    %v412 = vadd.f32 %v406, %v407
    %v413 = vadd.f32 %v408, %v409
    %v414 = vadd.f32 %v410, %v411
    %v415 = vadd.f32 %v412, %v413
    %v416 = vadd.f32 %v415, %v414
    %v417 = vtanh.pop %v416
    %s418 = scalar_lea.vmem [#allocation2], 2
    %v419 = vld [vmem:[%s418] sm:$0x1]
    %v420 = vmul.f32 %v365, %v269
    %v421 = vmul.f32 %v378, %v271
    %v422 = vmul.f32 %v391, %v273
    %v423 = vmul.f32 %v404, %v275
    %v424 = vmul.f32 %v417, %v277
    %v425 = vadd.f32 %v419, %v420
    %v426 = vadd.f32 %v421, %v422
    %v427 = vadd.f32 %v423, %v424
    %v428 = vadd.f32 %v425, %v426
    %v429 = vadd.f32 %v428, %v427
    %v430 = vtanh.pop %v429
    %s431 = scalar_lea.vmem [#allocation2], 10
    %v432 = vld [vmem:[%s431] sm:$0x1]
    %v433 = vmul.f32 %v365, %v286
    %v434 = vmul.f32 %v378, %v288
    %v435 = vmul.f32 %v391, %v290
    %v436 = vmul.f32 %v404, %v292
    %v437 = vmul.f32 %v417, %v294
    %v438 = vadd.f32 %v432, %v433
    %v439 = vadd.f32 %v434, %v435
    %v440 = vadd.f32 %v436, %v437
    %v441 = vadd.f32 %v438, %v439
    %v442 = vadd.f32 %v441, %v440
    %v443 = vtanh.pop %v442
    %s444 = scalar_lea.vmem [#allocation2], 18
    %v445 = vld [vmem:[%s444] sm:$0x1]
    %v446 = vmul.f32 %v365, %v303
    %v447 = vmul.f32 %v378, %v305
    %v448 = vmul.f32 %v391, %v307
    %v449 = vmul.f32 %v404, %v309
    %v450 = vmul.f32 %v417, %v311
    %v451 = vadd.f32 %v445, %v446
    %v452 = vadd.f32 %v447, %v448
    %v453 = vadd.f32 %v449, %v450
    %v454 = vadd.f32 %v451, %v452
    %v455 = vadd.f32 %v454, %v453
    %v456 = vtanh.pop %v455
    %s457 = scalar_lea.vmem [#allocation2], 26
    %v458 = vld [vmem:[%s457] sm:$0x1]
    %v459 = vmul.f32 %v365, %v320
    %v460 = vmul.f32 %v378, %v322
    %v461 = vmul.f32 %v391, %v324
    %v462 = vmul.f32 %v404, %v326
    %v463 = vmul.f32 %v417, %v328
    %v464 = vadd.f32 %v458, %v459
    %v465 = vadd.f32 %v460, %v461
    %v466 = vadd.f32 %v462, %v463
    %v467 = vadd.f32 %v464, %v465
    %v468 = vadd.f32 %v467, %v466
    %v469 = vtanh.pop %v468
    %s470 = scalar_lea.vmem [#allocation2], 34
    %v471 = vld [vmem:[%s470] sm:$0x1]
    %v472 = vmul.f32 %v365, %v337
    %v473 = vmul.f32 %v378, %v339
    %v474 = vmul.f32 %v391, %v341
    %v475 = vmul.f32 %v404, %v343
    %v476 = vmul.f32 %v417, %v345
    %v477 = vadd.f32 %v471, %v472
    %v478 = vadd.f32 %v473, %v474
    %v479 = vadd.f32 %v475, %v476
    %v480 = vadd.f32 %v477, %v478
    %v481 = vadd.f32 %v480, %v479
    %v482 = vtanh.pop %v481
    %s483 = scalar_lea.vmem [#allocation2], 3
    %v484 = vld [vmem:[%s483] sm:$0x1]
    %v485 = vmul.f32 %v430, %v269
    %v486 = vmul.f32 %v443, %v271
    %v487 = vmul.f32 %v456, %v273
    %v488 = vmul.f32 %v469, %v275
    %v489 = vmul.f32 %v482, %v277
    %v490 = vadd.f32 %v484, %v485
    %v491 = vadd.f32 %v486, %v487
    %v492 = vadd.f32 %v488, %v489
    %v493 = vadd.f32 %v490, %v491
    %v494 = vadd.f32 %v493, %v492
    %v495 = vtanh.pop %v494
    %s496 = scalar_lea.vmem [#allocation2], 11
    %v497 = vld [vmem:[%s496] sm:$0x1]
    %v498 = vmul.f32 %v430, %v286
    %v499 = vmul.f32 %v443, %v288
    %v500 = vmul.f32 %v456, %v290
    %v501 = vmul.f32 %v469, %v292
    %v502 = vmul.f32 %v482, %v294
    %v503 = vadd.f32 %v497, %v498
    %v504 = vadd.f32 %v499, %v500
    %v505 = vadd.f32 %v501, %v502
    %v506 = vadd.f32 %v503, %v504
    %v507 = vadd.f32 %v506, %v505
    %v508 = vtanh.pop %v507
    %s509 = scalar_lea.vmem [#allocation2], 19
    %v510 = vld [vmem:[%s509] sm:$0x1]
    %v511 = vmul.f32 %v430, %v303
    %v512 = vmul.f32 %v443, %v305
    %v513 = vmul.f32 %v456, %v307
    %v514 = vmul.f32 %v469, %v309
    %v515 = vmul.f32 %v482, %v311
    %v516 = vadd.f32 %v510, %v511
    %v517 = vadd.f32 %v512, %v513
    %v518 = vadd.f32 %v514, %v515
    %v519 = vadd.f32 %v516, %v517
    %v520 = vadd.f32 %v519, %v518
    %v521 = vtanh.pop %v520
    %s522 = scalar_lea.vmem [#allocation2], 27
    %v523 = vld [vmem:[%s522] sm:$0x1]
    %v524 = vmul.f32 %v430, %v320
    %v525 = vmul.f32 %v443, %v322
    %v526 = vmul.f32 %v456, %v324
    %v527 = vmul.f32 %v469, %v326
    %v528 = vmul.f32 %v482, %v328
    %v529 = vadd.f32 %v523, %v524
    %v530 = vadd.f32 %v525, %v526
    %v531 = vadd.f32 %v527, %v528
    %v532 = vadd.f32 %v529, %v530
    %v533 = vadd.f32 %v532, %v531
    %v534 = vtanh.pop %v533
    %s535 = scalar_lea.vmem [#allocation2], 35
    %v536 = vld [vmem:[%s535] sm:$0x1]
    %v537 = vmul.f32 %v430, %v337
    %v538 = vmul.f32 %v443, %v339
    %v539 = vmul.f32 %v456, %v341
    %v540 = vmul.f32 %v469, %v343
    %v541 = vmul.f32 %v482, %v345
    %v542 = vadd.f32 %v536, %v537
    %v543 = vadd.f32 %v538, %v539
    %v544 = vadd.f32 %v540, %v541
    %v545 = vadd.f32 %v542, %v543
    %v546 = vadd.f32 %v545, %v544
    %v547 = vtanh.pop %v546
    %s548 = scalar_lea.vmem [#allocation2], 4
    %v549 = vld [vmem:[%s548] sm:$0x1]
    %v550 = vmul.f32 %v495, %v269
    %v551 = vmul.f32 %v508, %v271
    %v552 = vmul.f32 %v521, %v273
    %v553 = vmul.f32 %v534, %v275
    %v554 = vmul.f32 %v547, %v277
    %v555 = vadd.f32 %v549, %v550
    %v556 = vadd.f32 %v551, %v552
    %v557 = vadd.f32 %v553, %v554
    %v558 = vadd.f32 %v555, %v556
    %v559 = vadd.f32 %v558, %v557
    %v560 = vtanh.pop %v559
    %s561 = scalar_lea.vmem [#allocation2], 12
    %v562 = vld [vmem:[%s561] sm:$0x1]
    %v563 = vmul.f32 %v495, %v286
    %v564 = vmul.f32 %v508, %v288
    %v565 = vmul.f32 %v521, %v290
    %v566 = vmul.f32 %v534, %v292
    %v567 = vmul.f32 %v547, %v294
    %v568 = vadd.f32 %v562, %v563
    %v569 = vadd.f32 %v564, %v565
    %v570 = vadd.f32 %v566, %v567
    %v571 = vadd.f32 %v568, %v569
    %v572 = vadd.f32 %v571, %v570
    %v573 = vtanh.pop %v572
    %s574 = scalar_lea.vmem [#allocation2], 20
    %v575 = vld [vmem:[%s574] sm:$0x1]
    %v576 = vmul.f32 %v495, %v303
    %v577 = vmul.f32 %v508, %v305
    %v578 = vmul.f32 %v521, %v307
    %v579 = vmul.f32 %v534, %v309
    %v580 = vmul.f32 %v547, %v311
    %v581 = vadd.f32 %v575, %v576
    %v582 = vadd.f32 %v577, %v578
    %v583 = vadd.f32 %v579, %v580
    %v584 = vadd.f32 %v581, %v582
    %v585 = vadd.f32 %v584, %v583
    %v586 = vtanh.pop %v585
    %s587 = scalar_lea.vmem [#allocation2], 28
    %v588 = vld [vmem:[%s587] sm:$0x1]
    %v589 = vmul.f32 %v495, %v320
    %v590 = vmul.f32 %v508, %v322
    %v591 = vmul.f32 %v521, %v324
    %v592 = vmul.f32 %v534, %v326
    %v593 = vmul.f32 %v547, %v328
    %v594 = vadd.f32 %v588, %v589
    %v595 = vadd.f32 %v590, %v591
    %v596 = vadd.f32 %v592, %v593
    %v597 = vadd.f32 %v594, %v595
    %v598 = vadd.f32 %v597, %v596
    %v599 = vtanh.pop %v598
    %s600 = scalar_lea.vmem [#allocation2], 36
    %v601 = vld [vmem:[%s600] sm:$0x1]
    %v602 = vmul.f32 %v495, %v337
    %v603 = vmul.f32 %v508, %v339
    %v604 = vmul.f32 %v521, %v341
    %v605 = vmul.f32 %v534, %v343
    %v606 = vmul.f32 %v547, %v345
    %v607 = vadd.f32 %v601, %v602
    %v608 = vadd.f32 %v603, %v604
    %v609 = vadd.f32 %v605, %v606
    %v610 = vadd.f32 %v607, %v608
    %v611 = vadd.f32 %v610, %v609
    %v612 = vtanh.pop %v611
    %s613 = scalar_lea.vmem [#allocation2], 5
    %v614 = vld [vmem:[%s613] sm:$0x1]
    %v615 = vmul.f32 %v560, %v269
    %v616 = vmul.f32 %v573, %v271
    %v617 = vmul.f32 %v586, %v273
    %v618 = vmul.f32 %v599, %v275
    %v619 = vmul.f32 %v612, %v277
    %v620 = vadd.f32 %v614, %v615
    %v621 = vadd.f32 %v616, %v617
    %v622 = vadd.f32 %v618, %v619
    %v623 = vadd.f32 %v620, %v621
    %v624 = vadd.f32 %v623, %v622
    %v625 = vtanh.pop %v624
    %s626 = scalar_lea.vmem [#allocation2], 13
    %v627 = vld [vmem:[%s626] sm:$0x1]
    %v628 = vmul.f32 %v560, %v286
    %v629 = vmul.f32 %v573, %v288
    %v630 = vmul.f32 %v586, %v290
    %v631 = vmul.f32 %v599, %v292
    %v632 = vmul.f32 %v612, %v294
    %v633 = vadd.f32 %v627, %v628
    %v634 = vadd.f32 %v629, %v630
    %v635 = vadd.f32 %v631, %v632
    %v636 = vadd.f32 %v633, %v634
    %v637 = vadd.f32 %v636, %v635
    %v638 = vtanh.pop %v637
    %s639 = scalar_lea.vmem [#allocation2], 21
    %v640 = vld [vmem:[%s639] sm:$0x1]
    %v641 = vmul.f32 %v560, %v303
    %v642 = vmul.f32 %v573, %v305
    %v643 = vmul.f32 %v586, %v307
    %v644 = vmul.f32 %v599, %v309
    %v645 = vmul.f32 %v612, %v311
    %v646 = vadd.f32 %v640, %v641
    %v647 = vadd.f32 %v642, %v643
    %v648 = vadd.f32 %v644, %v645
    %v649 = vadd.f32 %v646, %v647
    %v650 = vadd.f32 %v649, %v648
    %v651 = vtanh.pop %v650
    %s652 = scalar_lea.vmem [#allocation2], 29
    %v653 = vld [vmem:[%s652] sm:$0x1]
    %v654 = vmul.f32 %v560, %v320
    %v655 = vmul.f32 %v573, %v322
    %v656 = vmul.f32 %v586, %v324
    %v657 = vmul.f32 %v599, %v326
    %v658 = vmul.f32 %v612, %v328
    %v659 = vadd.f32 %v653, %v654
    %v660 = vadd.f32 %v655, %v656
    %v661 = vadd.f32 %v657, %v658
    %v662 = vadd.f32 %v659, %v660
    %v663 = vadd.f32 %v662, %v661
    %v664 = vtanh.pop %v663
    %s665 = scalar_lea.vmem [#allocation2], 37
    %v666 = vld [vmem:[%s665] sm:$0x1]
    %v667 = vmul.f32 %v560, %v337
    %v668 = vmul.f32 %v573, %v339
    %v669 = vmul.f32 %v586, %v341
    %v670 = vmul.f32 %v599, %v343
    %v671 = vmul.f32 %v612, %v345
    %v672 = vadd.f32 %v666, %v667
    %v673 = vadd.f32 %v668, %v669
    %v674 = vadd.f32 %v670, %v671
    %v675 = vadd.f32 %v672, %v673
    %v676 = vadd.f32 %v675, %v674
    %v677 = vtanh.pop %v676
    %s678 = scalar_lea.vmem [#allocation2], 6
    %v679 = vld [vmem:[%s678] sm:$0x1]
    %v680 = vmul.f32 %v625, %v269
    %v681 = vmul.f32 %v638, %v271
    %v682 = vmul.f32 %v651, %v273
    %v683 = vmul.f32 %v664, %v275
    %v684 = vmul.f32 %v677, %v277
    %v685 = vadd.f32 %v679, %v680
    %v686 = vadd.f32 %v681, %v682
    %v687 = vadd.f32 %v683, %v684
    %v688 = vadd.f32 %v685, %v686
    %v689 = vadd.f32 %v688, %v687
    %v690 = vtanh.pop %v689
    %s691 = scalar_lea.vmem [#allocation2], 14
    %v692 = vld [vmem:[%s691] sm:$0x1]
    %v693 = vmul.f32 %v625, %v286
    %v694 = vmul.f32 %v638, %v288
    %v695 = vmul.f32 %v651, %v290
    %v696 = vmul.f32 %v664, %v292
    %v697 = vmul.f32 %v677, %v294
    %v698 = vadd.f32 %v692, %v693
    %v699 = vadd.f32 %v694, %v695
    %v700 = vadd.f32 %v696, %v697
    %v701 = vadd.f32 %v698, %v699
    %v702 = vadd.f32 %v701, %v700
    %v703 = vtanh.pop %v702
    %s704 = scalar_lea.vmem [#allocation2], 22
    %v705 = vld [vmem:[%s704] sm:$0x1]
    %v706 = vmul.f32 %v625, %v303
    %v707 = vmul.f32 %v638, %v305
    %v708 = vmul.f32 %v651, %v307
    %v709 = vmul.f32 %v664, %v309
    %v710 = vmul.f32 %v677, %v311
    %v711 = vadd.f32 %v705, %v706
    %v712 = vadd.f32 %v707, %v708
    %v713 = vadd.f32 %v709, %v710
    %v714 = vadd.f32 %v711, %v712
    %v715 = vadd.f32 %v714, %v713
    %v716 = vtanh.pop %v715
    %s717 = scalar_lea.vmem [#allocation2], 30
    %v718 = vld [vmem:[%s717] sm:$0x1]
    %v719 = vmul.f32 %v625, %v320
    %v720 = vmul.f32 %v638, %v322
    %v721 = vmul.f32 %v651, %v324
    %v722 = vmul.f32 %v664, %v326
    %v723 = vmul.f32 %v677, %v328
    %v724 = vadd.f32 %v718, %v719
    %v725 = vadd.f32 %v720, %v721
    %v726 = vadd.f32 %v722, %v723
    %v727 = vadd.f32 %v724, %v725
    %v728 = vadd.f32 %v727, %v726
    %v729 = vtanh.pop %v728
    %s730 = scalar_lea.vmem [#allocation2], 38
    %v731 = vld [vmem:[%s730] sm:$0x1]
    %v732 = vmul.f32 %v625, %v337
    %v733 = vmul.f32 %v638, %v339
    %v734 = vmul.f32 %v651, %v341
    %v735 = vmul.f32 %v664, %v343
    %v736 = vmul.f32 %v677, %v345
    %v737 = vadd.f32 %v731, %v732
    %v738 = vadd.f32 %v733, %v734
    %v739 = vadd.f32 %v735, %v736
    %v740 = vadd.f32 %v737, %v738
    %v741 = vadd.f32 %v740, %v739
    %v742 = vtanh.pop %v741
    %s743 = scalar_lea.vmem [#allocation2], 7
    %v744 = vld [vmem:[%s743] sm:$0x1]
    %v745 = vmul.f32 %v690, %v269
    %v746 = vmul.f32 %v703, %v271
    %v747 = vmul.f32 %v716, %v273
    %v748 = vmul.f32 %v729, %v275
    %v749 = vmul.f32 %v742, %v277
    %v750 = vadd.f32 %v744, %v745
    %v751 = vadd.f32 %v746, %v747
    %v752 = vadd.f32 %v748, %v749
    %v753 = vadd.f32 %v750, %v751
    %v754 = vadd.f32 %v753, %v752
    %v755 = vtanh.pop %v754
    %s756 = scalar_lea.vmem [#allocation2], 15
    %v757 = vld [vmem:[%s756] sm:$0x1]
    %v758 = vmul.f32 %v690, %v286
    %v759 = vmul.f32 %v703, %v288
    %v760 = vmul.f32 %v716, %v290
    %v761 = vmul.f32 %v729, %v292
    %v762 = vmul.f32 %v742, %v294
    %v763 = vadd.f32 %v757, %v758
    %v764 = vadd.f32 %v759, %v760
    %v765 = vadd.f32 %v761, %v762
    %v766 = vadd.f32 %v763, %v764
    %v767 = vadd.f32 %v766, %v765
    %v768 = vtanh.pop %v767
    %s769 = scalar_lea.vmem [#allocation2], 23
    %v770 = vld [vmem:[%s769] sm:$0x1]
    %v771 = vmul.f32 %v690, %v303
    %v772 = vmul.f32 %v703, %v305
    %v773 = vmul.f32 %v716, %v307
    %v774 = vmul.f32 %v729, %v309
    %v775 = vmul.f32 %v742, %v311
    %v776 = vadd.f32 %v770, %v771
    %v777 = vadd.f32 %v772, %v773
    %v778 = vadd.f32 %v774, %v775
    %v779 = vadd.f32 %v776, %v777
    %v780 = vadd.f32 %v779, %v778
    %v781 = vtanh.pop %v780
    %s782 = scalar_lea.vmem [#allocation2], 31
    %v783 = vld [vmem:[%s782] sm:$0x1]
    %v784 = vmul.f32 %v690, %v320
    %v785 = vmul.f32 %v703, %v322
    %v786 = vmul.f32 %v716, %v324
    %v787 = vmul.f32 %v729, %v326
    %v788 = vmul.f32 %v742, %v328
    %v789 = vadd.f32 %v783, %v784
    %v790 = vadd.f32 %v785, %v786
    %v791 = vadd.f32 %v787, %v788
    %v792 = vadd.f32 %v789, %v790
    %v793 = vadd.f32 %v792, %v791
    %v794 = vtanh.pop %v793
    %s795 = scalar_lea.vmem [#allocation2], 39
    %v796 = vld [vmem:[%s795] sm:$0x1]
    %v797 = vmul.f32 %v690, %v337
    %v798 = vmul.f32 %v703, %v339
    %v799 = vmul.f32 %v716, %v341
    %v800 = vmul.f32 %v729, %v343
    %v801 = vmul.f32 %v742, %v345
    %v802 = vadd.f32 %v796, %v797
    %v803 = vadd.f32 %v798, %v799
    %v804 = vadd.f32 %v800, %v801
    %v805 = vadd.f32 %v802, %v803
    %v806 = vadd.f32 %v805, %v804
    %v807 = vtanh.pop %v806
    %808 = vst [vmem:[#allocation3] sm:$0x1] %v755
    %809 = vst [vmem:[%s260] sm:$0x1] %v768
    %810 = vst [vmem:[%s262] sm:$0x1] %v781
    %811 = vst [vmem:[%s264] sm:$0x1] %v794
    %812 = vst [vmem:[%s266] sm:$0x1] %v807
    // Predicated region
    $region46: #{tpu_custom_call.1} parent=1 // pred_check
      %p813 = pneg %p108
    $region47: #{tpu_custom_call.1} parent=1 // pred_check_branch
      %815 = sbr.rel (%p813) target = $region49
    $region48: #{tpu_custom_call.1} parent=1 // pred_region
      %v816 = vmax.f32 %v755, 0.0
      %v817 = vstv %s102
      %v818 = vmul.f32 %v816, %v817
      %v819 = vstv %s107
      %v820 = vadd.f32 %v818, %v819
      %v821 = vmax.f32 %v768, 0.0
      %v822 = vstv %s103
      %v823 = vmul.f32 %v821, %v822
      %v824 = vadd.f32 %v820, %v823
      %v825 = vmax.f32 %v781, 0.0
      %v826 = vstv %s104
      %v827 = vmul.f32 %v825, %v826
      %v828 = vadd.f32 %v824, %v827
      %v829 = vmax.f32 %v794, 0.0
      %v830 = vstv %s105
      %v831 = vmul.f32 %v829, %v830
      %v832 = vadd.f32 %v828, %v831
      %v833 = vmax.f32 %v807, 0.0
      %v834 = vstv %s106
      %v835 = vmul.f32 %v833, %v834
      %v836 = vadd.f32 %v832, %v835
      %837 = vst [vmem:[#allocation13] sm:$0x1] %v836
    $region49: #{tpu_custom_call.1} parent=1 // pred_fallthru
      _
    // Predicated region
    $region50: #{tpu_custom_call.1} parent=1 // pred_check
      _
    $region51: #{tpu_custom_call.1} parent=1 // pred_check_branch
      %839 = sbr.rel (0) target = $region53
    $region52: #{tpu_custom_call.1} parent=1 // pred_region
      %s841 = ssub.s32 16, 16
      %842 = vsyncadd [#allocation6], %s841
      %s844 = sshll.u32 [#allocation13], 4
      %s845 = int_to_ptr.vmem [resolvable:$true] %s844
      %847 = dma.vmem_to_hbm [thread:$0]  %s845, 16, %s6, [#allocation6]
    $region53: #{tpu_custom_call.1} parent=1 // pred_fallthru
      _
    // Predicated region
    $region54: #{tpu_custom_call.1} parent=1 // pred_check
      _
    $region55: #{tpu_custom_call.1} parent=1 // pred_check_branch
      %849 = sbr.rel (0) target = $region57
    $region56: #{tpu_custom_call.1} parent=1 // pred_region
      %850 = dma.done [#allocation6], 16
    $region57: #{tpu_custom_call.1} parent=1 // pred_fallthru
      _
    %851 = vsyncpa [#allocation6], 1
    %852 = vsyncpa [#allocation7], 1
    %853 = vsyncpa [#allocation11], 1
    %854 = vsyncpa [#allocation8], 1

</llo_original>
